<compile_context>
chip_gen: v6e
topology: v6e:2x2x1
jax: 0.10.0
libtpu: 0.0.40
codegen_flags: <defaults>
</compile_context>

<pallas_src>
import jax
import jax.numpy as jnp
from jax.experimental import pallas as pl
from jax.experimental.pallas import tpu as pltpu


_OUT_LANES = 8  # lane-padded output; wrapper slices [:, :3]


def _silu(x):
    return x * jax.nn.sigmoid(x)


def _equivariant_vector_kernel(
    x_ref, v_ref,
    w1ab_ref,                        # (H, H+O1)          block-1 [vec1_proj | vec2_proj]
    wu10x_ref, wu10v_ref, bu10_ref,  # (H,H),(H,H),(1,H)  block-1 update_net[0]
    wu12_ref, bu12_ref,              # (H,2O1),(1,2O1)    block-1 update_net[2]
    w2a_ref, w2b_ref,                # (O1,O1),(1,O1)     block-2 vec1_proj / vec2_proj
    wu20x_ref, wu20v_ref, bu20_ref,  # (O1,O1),(O1,O1),(1,O1)
    wu22g_ref, bu22g_ref,            # (1,O1),(1,1)       gate column of update_net[2]
    out_ref,
):
    f32 = jnp.float32
    cdt = w1ab_ref.dtype             # MXU compute dtype (bf16 on the fast path)
    tn, H = x_ref.shape
    O1 = H // 2

    x = x_ref[...].astype(cdt)                                        # (TN, H)

    # ---------------- Block 1: H -> O1 (scalar_activation=True) ----------------
    # Per spatial component: one fused (TN,H)@(H,H+O1) matmul gives vec1_proj
    # and vec2_proj together; lane slices split them (free when H % 128 == 0).
    vec2 = []                         # per-component (TN, O1) f32
    n1sq = None                       # sum_c p1_c^2 -> (TN, H) f32
    for c in range(3):
        vc = v_ref[:, c * H:(c + 1) * H].astype(cdt)                  # (TN, H)
        pv = jnp.dot(vc, w1ab_ref[...], preferred_element_type=f32)   # (TN, H+O1)
        p1c = pv[:, :H]
        vec2.append(pv[:, H:])
        sq = p1c * p1c
        n1sq = sq if n1sq is None else n1sq + sq
    vec1 = jnp.sqrt(n1sq)                                             # (TN, H)

    # update_net[0]:  concat([x, vec1]) @ W  ==  x @ Wx + vec1 @ Wv
    h = _silu(jnp.dot(x, wu10x_ref[...], preferred_element_type=f32)
              + jnp.dot(vec1.astype(cdt), wu10v_ref[...],
                        preferred_element_type=f32)
              + bu10_ref[...])                                        # (TN, H)
    # update_net[2]: one (H, 2*O1) matmul, lane-sliced at O1.
    u = (jnp.dot(h.astype(cdt), wu12_ref[...], preferred_element_type=f32)
         + bu12_ref[...])                                             # (TN, 2*O1)
    x1 = _silu(u[:, :O1])                                             # (TN, O1)
    gate1 = u[:, O1:]                                                 # (TN, O1)

    # ---------------- Block 2: O1 -> 1 (scalar_activation=False) ---------------
    vec2b = []                        # per-component (TN, 1) f32
    n2sq = None                       # sum_c p2_c^2 -> (TN, O1) f32
    for c in range(3):
        v1c = gate1 * vec2[c]                                         # (TN, O1)
        p2c = jnp.dot(v1c.astype(cdt), w2a_ref[...],
                      preferred_element_type=f32)                     # (TN, O1)
        sq = p2c * p2c
        n2sq = sq if n2sq is None else n2sq + sq
        # (O1 -> 1) projection: VPU multiply + lane reduction (no tiny matmul).
        vec2b.append(jnp.sum(v1c * w2b_ref[...], axis=-1, keepdims=True))
    vec1b = jnp.sqrt(n2sq)                                            # (TN, O1)

    h2 = _silu(jnp.dot(x1.astype(cdt), wu20x_ref[...],
                       preferred_element_type=f32)
               + jnp.dot(vec1b.astype(cdt), wu20v_ref[...],
                         preferred_element_type=f32)
               + bu20_ref[...])                                       # (TN, O1)
    gate2 = (jnp.sum(h2 * wu22g_ref[...], axis=-1, keepdims=True)
             + bu22g_ref[...])                                        # (TN, 1)

    pad = jnp.zeros((tn, _OUT_LANES - 3), f32)
    out_ref[...] = jnp.concatenate(
        [gate2 * vec2b[0], gate2 * vec2b[1], gate2 * vec2b[2], pad], axis=-1)


# ----------------------------- wrapper helpers -----------------------------
def _resident_spec(shape):
    """VMEM-resident weight: constant index_map, single-buffered."""
    nd = len(shape)
    idx = lambda i, _nd=nd: (0,) * _nd
    try:
        return pl.BlockSpec(shape, idx, pipeline_mode=pl.Buffered(1))
    except TypeError:  # very old jax without pipeline_mode: default buffering
        return pl.BlockSpec(shape, idx)


def _tpu_vmem_bytes():
    try:
        return int(getattr(pltpu.get_tpu_info(), "vmem_capacity_bytes",
                           64 * 1024 * 1024))
    except Exception:
        return 64 * 1024 * 1024


def _num_tensorcores():
    try:
        kind = jax.devices()[0].device_kind.lower()
        return 2 if ("v7" in kind or "7x" in kind) else 1
    except Exception:
        return 1


def equivariant_vector(x, vec, params, *, tile_n=None,
                       compute_dtype=jnp.bfloat16):
    """x: (N, H) f32, vec: (N, 3, H) f32 -> (N, 3) f32.

    Fast path assumes H % 256 == 0 (so H and O1 = H // 2 are multiples of
    128); other H are correct but incur relayouts / lane-padded MXU tiles.
    """
    N, H = x.shape
    O1 = H // 2
    (w1a, w1b, wu10, bu10, wu12, bu12,
     w2a, w2b, wu20, bu20, wu22, bu22) = params

    cdt = jnp.dtype(compute_dtype)
    f32 = jnp.float32

    # --- weight prep (once, outside the kernel) ------------------------------
    w1ab = jnp.concatenate([w1a, w1b], axis=1).astype(cdt)   # (H, H+O1)
    wu10_x = wu10[:H].astype(cdt)                            # (H, H)
    wu10_v = wu10[H:].astype(cdt)                            # (H, H)
    wu12_c = wu12.astype(cdt)                                # (H, 2*O1)
    w2a_c = w2a.astype(cdt)                                  # (O1, O1)
    wu20_x = wu20[:O1].astype(cdt)                           # (O1, O1)
    wu20_v = wu20[O1:].astype(cdt)                           # (O1, O1)
    # VPU-side weights and biases stay f32.
    w2b_row = w2b.reshape(1, O1).astype(f32)                 # (1, O1)
    wu22_g = wu22[:, 1:2].reshape(1, O1).astype(f32)         # gate column (1, O1)
    bu22_g = bu22[:, 1:2].astype(f32)                        # (1, 1)
    bu10_f = bu10.astype(f32)
    bu12_f = bu12.astype(f32)
    bu20_f = bu20.astype(f32)

    # --- per-generation tiling ------------------------------------------------
    vmem_bytes = _tpu_vmem_bytes()
    if vmem_bytes >= 96 * 1024 * 1024:            # v5e / v6e: 128 MiB physical
        default_tn, vmem_limit = 512, 96 * 1024 * 1024
    else:                                         # v7x: 64 MiB per TensorCore
        default_tn, vmem_limit = 256, 48 * 1024 * 1024
    if tile_n is None:
        tile_n = default_tn
    tn = max(8, (min(int(tile_n), ((N + 7) // 8) * 8) // 8) * 8)

    n_tiles = pl.cdiv(N, tn)
    if n_tiles > 1 and n_tiles % 2 == 1 and _num_tensorcores() >= 2:
        n_tiles += 1   # even tile count -> balanced "parallel" split over 2 TCs
    n_pad = n_tiles * tn

    x2 = x.astype(f32)
    v2 = vec.astype(f32).reshape(N, 3 * H)        # free contiguous view
    if n_pad != N:
        x2 = jnp.pad(x2, ((0, n_pad - N), (0, 0)))
        v2 = jnp.pad(v2, ((0, n_pad - N), (0, 0)))

    weights = (w1ab, wu10_x, wu10_v, bu10_f, wu12_c, bu12_f,
               w2a_c, w2b_row, wu20_x, wu20_v, bu20_f, wu22_g, bu22_g)

    in_specs = ([pl.BlockSpec((tn, H), lambda i: (i, 0)),
                 pl.BlockSpec((tn, 3 * H), lambda i: (i, 0))]
                + [_resident_spec(w.shape) for w in weights])

    out = pl.pallas_call(
        _equivariant_vector_kernel,
        out_shape=jax.ShapeDtypeStruct((n_pad, _OUT_LANES), f32),
        grid=(n_tiles,),
        in_specs=in_specs,
        out_specs=pl.BlockSpec((tn, _OUT_LANES), lambda i: (i, 0)),
        compiler_params=pltpu.CompilerParams(
            dimension_semantics=("parallel",),
            vmem_limit_bytes=vmem_limit),
    )(x2, v2, *weights)
    return out[:N, :3]


# ----------------------------- parameter construction -----------------------------
def _xavier(key, fan_in, fan_out):
    limit = (6.0 / (fan_in + fan_out)) ** 0.5
    # stored as (in, out) so the model computes y = x @ W  (PyTorch does x @ W^T)
    return jax.random.uniform(key, (fan_in, fan_out), jnp.float32, -limit, limit)


def make_params(key, hidden):
    h1, o1 = hidden, hidden // 2         # block 1: H -> H//2, intermediate = H
    h2, o2 = hidden // 2, 1              # block 2: H//2 -> 1, intermediate = H//2
    ks = jax.random.split(key, 12)
    params = (
        _xavier(ks[0], h1, h1),                                    # vec1_proj (block 1)
        _xavier(ks[1], h1, o1),                                    # vec2_proj (block 1)
        _xavier(ks[2], 2 * h1, h1),                                # update_net[0] weight
        0.1 * jax.random.normal(ks[3], (1, h1), jnp.float32),      # update_net[0] bias
        _xavier(ks[4], h1, 2 * o1),                                # update_net[2] weight
        0.1 * jax.random.normal(ks[5], (1, 2 * o1), jnp.float32),  # update_net[2] bias
        _xavier(ks[6], h2, h2),                                    # vec1_proj (block 2)
        _xavier(ks[7], h2, o2),                                    # vec2_proj (block 2)
        _xavier(ks[8], 2 * h2, h2),                                # update_net[0] weight
        0.1 * jax.random.normal(ks[9], (1, h2), jnp.float32),      # update_net[0] bias
        _xavier(ks[10], h2, 2 * o2),                               # update_net[2] weight
        0.1 * jax.random.normal(ks[11], (1, 2 * o2), jnp.float32), # update_net[2] bias
    )
    return params


# ----------------------------- pure-JAX reference -----------------------------
def _geb_ref(x, v, w_v1, w_v2, w_u0, b_u0, w_u2, b_u2, out_ch, scalar_act):
    vec1 = jnp.linalg.norm(v @ w_v1, axis=-2)         # (N, Hin)
    vec2 = v @ w_v2                                   # (N, 3, out)
    xc = jnp.concatenate([x, vec1], axis=-1)
    u = _silu(xc @ w_u0 + b_u0) @ w_u2 + b_u2
    x_new, gate = u[:, :out_ch], u[:, out_ch:]
    v_new = gate[:, None, :] * vec2
    if scalar_act:
        x_new = _silu(x_new)
    return x_new, v_new


def equivariant_vector_ref(x, vec, params):
    (w1a, w1b, wu10, bu10, wu12, bu12,
     w2a, w2b, wu20, bu20, wu22, bu22) = params
    o1 = w1b.shape[1]
    x, v = _geb_ref(x, vec, w1a, w1b, wu10, bu10, wu12, bu12, o1, True)
    x, v = _geb_ref(x, v, w2a, w2b, wu20, bu20, wu22, bu22, 1, False)
    return jnp.squeeze(v)                             # (N, 3)


if __name__ == "__main__":
    N, HIDDEN = 64, 32
    key = jax.random.PRNGKey(0)
    kx, kv, kp = jax.random.split(key, 3)

    x = jax.random.normal(kx, (N, HIDDEN), jnp.float32)
    vec = jax.random.normal(kv, (N, 3, HIDDEN), jnp.float32)
    params = make_params(kp, HIDDEN)

    ref = equivariant_vector_ref(x, vec, params)

    # Exact-math path (f32 MXU), tile_n=32 -> grid=(2,): exercises the
    # multi-tile / resident-weight plumbing with tight tolerance.
    out_f32 = jax.block_until_ready(
        equivariant_vector(x, vec, params, tile_n=32,
                           compute_dtype=jnp.float32))
    assert out_f32.shape == (N, 3), out_f32.shape
    err32 = float(jnp.max(jnp.abs(out_f32 - ref)))
    assert jnp.allclose(out_f32, ref, rtol=1e-4, atol=1e-4), err32

    # Production path: bf16 MXU matmuls, f32 accumulation / elementwise math.
    out_bf = jax.block_until_ready(
        equivariant_vector(x, vec, params, tile_n=32))
    assert out_bf.shape == (N, 3), out_bf.shape
    rel = float(jnp.max(jnp.abs(out_bf - ref))
                / (jnp.max(jnp.abs(ref)) + 1e-6))
    assert rel < 5e-2, rel

    print("KERNEL_OK")
</pallas_src>

<mosaic_0001>
module attributes {stable_mosaic.version = 11 : i64} {
  func.func @_equivariant_vector_kernel(%arg0: i32, %arg1: memref<32x32xf32, #tpu.memory_space<vmem>>, %arg2: memref<32x96xf32, #tpu.memory_space<vmem>>, %arg3: memref<32x48xf32, #tpu.memory_space<vmem>>, %arg4: memref<32x32xf32, #tpu.memory_space<vmem>>, %arg5: memref<32x32xf32, #tpu.memory_space<vmem>>, %arg6: memref<1x32xf32, #tpu.memory_space<vmem>>, %arg7: memref<32x32xf32, #tpu.memory_space<vmem>>, %arg8: memref<1x32xf32, #tpu.memory_space<vmem>>, %arg9: memref<16x16xf32, #tpu.memory_space<vmem>>, %arg10: memref<1x16xf32, #tpu.memory_space<vmem>>, %arg11: memref<16x16xf32, #tpu.memory_space<vmem>>, %arg12: memref<16x16xf32, #tpu.memory_space<vmem>>, %arg13: memref<1x16xf32, #tpu.memory_space<vmem>>, %arg14: memref<1x16xf32, #tpu.memory_space<vmem>>, %arg15: memref<1x1xf32, #tpu.memory_space<vmem>>, %arg16: memref<32x8xf32, #tpu.memory_space<vmem>>) attributes {dimension_semantics = [#tpu.dimension_semantics<parallel>], iteration_bounds = array<i64: 2>, scalar_prefetch = 0 : i64, scratch_operands = 0 : i64, tpu.core_type = #tpu.core_type<tc>, window_params = [{transform_indices = @transform_0, window_bounds = array<i64: 32, 32>}, {transform_indices = @transform_1, window_bounds = array<i64: 32, 96>}, {pipeline_mode = #tpu.pipeline_mode<synchronous>, transform_indices = @transform_2, window_bounds = array<i64: 32, 48>}, {pipeline_mode = #tpu.pipeline_mode<synchronous>, transform_indices = @transform_3, window_bounds = array<i64: 32, 32>}, {pipeline_mode = #tpu.pipeline_mode<synchronous>, transform_indices = @transform_4, window_bounds = array<i64: 32, 32>}, {pipeline_mode = #tpu.pipeline_mode<synchronous>, transform_indices = @transform_5, window_bounds = array<i64: 1, 32>}, {pipeline_mode = #tpu.pipeline_mode<synchronous>, transform_indices = @transform_6, window_bounds = array<i64: 32, 32>}, {pipeline_mode = #tpu.pipeline_mode<synchronous>, transform_indices = @transform_7, window_bounds = array<i64: 1, 32>}, {pipeline_mode = #tpu.pipeline_mode<synchronous>, transform_indices = @transform_8, window_bounds = array<i64: 16, 16>}, {pipeline_mode = #tpu.pipeline_mode<synchronous>, transform_indices = @transform_9, window_bounds = array<i64: 1, 16>}, {pipeline_mode = #tpu.pipeline_mode<synchronous>, transform_indices = @transform_10, window_bounds = array<i64: 16, 16>}, {pipeline_mode = #tpu.pipeline_mode<synchronous>, transform_indices = @transform_11, window_bounds = array<i64: 16, 16>}, {pipeline_mode = #tpu.pipeline_mode<synchronous>, transform_indices = @transform_12, window_bounds = array<i64: 1, 16>}, {pipeline_mode = #tpu.pipeline_mode<synchronous>, transform_indices = @transform_13, window_bounds = array<i64: 1, 16>}, {pipeline_mode = #tpu.pipeline_mode<synchronous>, transform_indices = @transform_14, window_bounds = array<i64: 1, 1>}, {transform_indices = @transform_15, window_bounds = array<i64: 32, 8>}]} {
    %c0 = arith.constant 0 : index
    %c0_0 = arith.constant 0 : index
    %0 = vector.load %arg1[%c0, %c0_0] : memref<32x32xf32, #tpu.memory_space<vmem>>, vector<32x32xf32>
    %c0_1 = arith.constant 0 : index
    %c0_2 = arith.constant 0 : index
    %1 = vector.load %arg2[%c0_1, %c0_2] : memref<32x96xf32, #tpu.memory_space<vmem>>, vector<32x32xf32>
    %c0_3 = arith.constant 0 : index
    %c0_4 = arith.constant 0 : index
    %2 = vector.load %arg3[%c0_3, %c0_4] : memref<32x48xf32, #tpu.memory_space<vmem>>, vector<32x48xf32>
    %cst = arith.constant dense<0.000000e+00> : vector<32x48xf32>
    %3 = tpu.matmul %1, %2, %cst {dimension_numbers = #tpu.dot_dimension_numbers<[1], [0], [0], [1], [0, 0, 1, 1], [], []>} : vector<32x32xf32>, vector<32x48xf32>, vector<32x48xf32> -> vector<32x48xf32>
    %4 = vector.extract_strided_slice %3 {offsets = [0, 0], sizes = [32, 32], strides = [1, 1]} : vector<32x48xf32> to vector<32x32xf32>
    %5 = vector.extract_strided_slice %3 {offsets = [0, 32], sizes = [32, 16], strides = [1, 1]} : vector<32x48xf32> to vector<32x16xf32>
    %6 = arith.mulf %4, %4 : vector<32x32xf32>
    %c0_5 = arith.constant 0 : index
    %c32 = arith.constant 32 : index
    %7 = vector.load %arg2[%c0_5, %c32] : memref<32x96xf32, #tpu.memory_space<vmem>>, vector<32x32xf32>
    %c0_6 = arith.constant 0 : index
    %c0_7 = arith.constant 0 : index
    %8 = vector.load %arg3[%c0_6, %c0_7] : memref<32x48xf32, #tpu.memory_space<vmem>>, vector<32x48xf32>
    %cst_8 = arith.constant dense<0.000000e+00> : vector<32x48xf32>
    %9 = tpu.matmul %7, %8, %cst_8 {dimension_numbers = #tpu.dot_dimension_numbers<[1], [0], [0], [1], [0, 0, 1, 1], [], []>} : vector<32x32xf32>, vector<32x48xf32>, vector<32x48xf32> -> vector<32x48xf32>
    %10 = vector.extract_strided_slice %9 {offsets = [0, 0], sizes = [32, 32], strides = [1, 1]} : vector<32x48xf32> to vector<32x32xf32>
    %11 = vector.extract_strided_slice %9 {offsets = [0, 32], sizes = [32, 16], strides = [1, 1]} : vector<32x48xf32> to vector<32x16xf32>
    %12 = arith.mulf %10, %10 : vector<32x32xf32>
    %13 = arith.addf %6, %12 : vector<32x32xf32>
    %c0_9 = arith.constant 0 : index
    %c64 = arith.constant 64 : index
    %14 = vector.load %arg2[%c0_9, %c64] : memref<32x96xf32, #tpu.memory_space<vmem>>, vector<32x32xf32>
    %c0_10 = arith.constant 0 : index
    %c0_11 = arith.constant 0 : index
    %15 = vector.load %arg3[%c0_10, %c0_11] : memref<32x48xf32, #tpu.memory_space<vmem>>, vector<32x48xf32>
    %cst_12 = arith.constant dense<0.000000e+00> : vector<32x48xf32>
    %16 = tpu.matmul %14, %15, %cst_12 {dimension_numbers = #tpu.dot_dimension_numbers<[1], [0], [0], [1], [0, 0, 1, 1], [], []>} : vector<32x32xf32>, vector<32x48xf32>, vector<32x48xf32> -> vector<32x48xf32>
    %17 = vector.extract_strided_slice %16 {offsets = [0, 0], sizes = [32, 32], strides = [1, 1]} : vector<32x48xf32> to vector<32x32xf32>
    %18 = vector.extract_strided_slice %16 {offsets = [0, 32], sizes = [32, 16], strides = [1, 1]} : vector<32x48xf32> to vector<32x16xf32>
    %19 = arith.mulf %17, %17 : vector<32x32xf32>
    %20 = arith.addf %13, %19 : vector<32x32xf32>
    %21 = math.sqrt %20 : vector<32x32xf32>
    %c0_13 = arith.constant 0 : index
    %c0_14 = arith.constant 0 : index
    %22 = vector.load %arg4[%c0_13, %c0_14] : memref<32x32xf32, #tpu.memory_space<vmem>>, vector<32x32xf32>
    %cst_15 = arith.constant dense<0.000000e+00> : vector<32x32xf32>
    %23 = tpu.matmul %0, %22, %cst_15 {dimension_numbers = #tpu.dot_dimension_numbers<[1], [0], [0], [1], [0, 0, 1, 1], [], []>} : vector<32x32xf32>, vector<32x32xf32>, vector<32x32xf32> -> vector<32x32xf32>
    %c0_16 = arith.constant 0 : index
    %c0_17 = arith.constant 0 : index
    %24 = vector.load %arg5[%c0_16, %c0_17] : memref<32x32xf32, #tpu.memory_space<vmem>>, vector<32x32xf32>
    %cst_18 = arith.constant dense<0.000000e+00> : vector<32x32xf32>
    %25 = tpu.matmul %21, %24, %cst_18 {dimension_numbers = #tpu.dot_dimension_numbers<[1], [0], [0], [1], [0, 0, 1, 1], [], []>} : vector<32x32xf32>, vector<32x32xf32>, vector<32x32xf32> -> vector<32x32xf32>
    %26 = arith.addf %23, %25 : vector<32x32xf32>
    %c0_19 = arith.constant 0 : index
    %c0_20 = arith.constant 0 : index
    %27 = vector.load %arg6[%c0_19, %c0_20] : memref<1x32xf32, #tpu.memory_space<vmem>>, vector<1x32xf32>
    %28 = vector.broadcast %27 : vector<1x32xf32> to vector<32x32xf32>
    %29 = arith.addf %26, %28 : vector<32x32xf32>
    %30 = arith.negf %29 : vector<32x32xf32>
    %31 = math.exp %30 : vector<32x32xf32>
    %cst_21 = arith.constant 1.000000e+00 : f32
    %32 = vector.broadcast %cst_21 : f32 to vector<32x32xf32>
    %33 = arith.addf %32, %31 : vector<32x32xf32>
    %34 = arith.divf %32, %33 : vector<32x32xf32>
    %35 = arith.mulf %29, %34 : vector<32x32xf32>
    %c0_22 = arith.constant 0 : index
    %c0_23 = arith.constant 0 : index
    %36 = vector.load %arg7[%c0_22, %c0_23] : memref<32x32xf32, #tpu.memory_space<vmem>>, vector<32x32xf32>
    %cst_24 = arith.constant dense<0.000000e+00> : vector<32x32xf32>
    %37 = tpu.matmul %35, %36, %cst_24 {dimension_numbers = #tpu.dot_dimension_numbers<[1], [0], [0], [1], [0, 0, 1, 1], [], []>} : vector<32x32xf32>, vector<32x32xf32>, vector<32x32xf32> -> vector<32x32xf32>
    %c0_25 = arith.constant 0 : index
    %c0_26 = arith.constant 0 : index
    %38 = vector.load %arg8[%c0_25, %c0_26] : memref<1x32xf32, #tpu.memory_space<vmem>>, vector<1x32xf32>
    %39 = vector.broadcast %38 : vector<1x32xf32> to vector<32x32xf32>
    %40 = arith.addf %37, %39 : vector<32x32xf32>
    %41 = vector.extract_strided_slice %40 {offsets = [0, 0], sizes = [32, 16], strides = [1, 1]} : vector<32x32xf32> to vector<32x16xf32>
    %42 = arith.negf %41 : vector<32x16xf32>
    %43 = math.exp %42 : vector<32x16xf32>
    %cst_27 = arith.constant 1.000000e+00 : f32
    %44 = vector.broadcast %cst_27 : f32 to vector<32x16xf32>
    %45 = arith.addf %44, %43 : vector<32x16xf32>
    %46 = arith.divf %44, %45 : vector<32x16xf32>
    %47 = arith.mulf %41, %46 : vector<32x16xf32>
    %48 = vector.extract_strided_slice %40 {offsets = [0, 16], sizes = [32, 16], strides = [1, 1]} : vector<32x32xf32> to vector<32x16xf32>
    %49 = arith.mulf %48, %5 : vector<32x16xf32>
    %c0_28 = arith.constant 0 : index
    %c0_29 = arith.constant 0 : index
    %50 = vector.load %arg9[%c0_28, %c0_29] : memref<16x16xf32, #tpu.memory_space<vmem>>, vector<16x16xf32>
    %cst_30 = arith.constant dense<0.000000e+00> : vector<32x16xf32>
    %51 = tpu.matmul %49, %50, %cst_30 {dimension_numbers = #tpu.dot_dimension_numbers<[1], [0], [0], [1], [0, 0, 1, 1], [], []>} : vector<32x16xf32>, vector<16x16xf32>, vector<32x16xf32> -> vector<32x16xf32>
    %52 = arith.mulf %51, %51 : vector<32x16xf32>
    %c0_31 = arith.constant 0 : index
    %c0_32 = arith.constant 0 : index
    %53 = vector.load %arg10[%c0_31, %c0_32] : memref<1x16xf32, #tpu.memory_space<vmem>>, vector<1x16xf32>
    %54 = vector.broadcast %53 : vector<1x16xf32> to vector<32x16xf32>
    %55 = arith.mulf %49, %54 : vector<32x16xf32>
    %cst_33 = arith.constant dense<0.000000e+00> : vector<32xf32>
    %56 = vector.multi_reduction <add>, %55, %cst_33 [1] : vector<32x16xf32> to vector<32xf32>
    %57 = vector.shape_cast %56 : vector<32xf32> to vector<32x1xf32>
    %58 = arith.mulf %48, %11 : vector<32x16xf32>
    %c0_34 = arith.constant 0 : index
    %c0_35 = arith.constant 0 : index
    %59 = vector.load %arg9[%c0_34, %c0_35] : memref<16x16xf32, #tpu.memory_space<vmem>>, vector<16x16xf32>
    %cst_36 = arith.constant dense<0.000000e+00> : vector<32x16xf32>
    %60 = tpu.matmul %58, %59, %cst_36 {dimension_numbers = #tpu.dot_dimension_numbers<[1], [0], [0], [1], [0, 0, 1, 1], [], []>} : vector<32x16xf32>, vector<16x16xf32>, vector<32x16xf32> -> vector<32x16xf32>
    %61 = arith.mulf %60, %60 : vector<32x16xf32>
    %62 = arith.addf %52, %61 : vector<32x16xf32>
    %c0_37 = arith.constant 0 : index
    %c0_38 = arith.constant 0 : index
    %63 = vector.load %arg10[%c0_37, %c0_38] : memref<1x16xf32, #tpu.memory_space<vmem>>, vector<1x16xf32>
    %64 = vector.broadcast %63 : vector<1x16xf32> to vector<32x16xf32>
    %65 = arith.mulf %58, %64 : vector<32x16xf32>
    %cst_39 = arith.constant dense<0.000000e+00> : vector<32xf32>
    %66 = vector.multi_reduction <add>, %65, %cst_39 [1] : vector<32x16xf32> to vector<32xf32>
    %67 = vector.shape_cast %66 : vector<32xf32> to vector<32x1xf32>
    %68 = arith.mulf %48, %18 : vector<32x16xf32>
    %c0_40 = arith.constant 0 : index
    %c0_41 = arith.constant 0 : index
    %69 = vector.load %arg9[%c0_40, %c0_41] : memref<16x16xf32, #tpu.memory_space<vmem>>, vector<16x16xf32>
    %cst_42 = arith.constant dense<0.000000e+00> : vector<32x16xf32>
    %70 = tpu.matmul %68, %69, %cst_42 {dimension_numbers = #tpu.dot_dimension_numbers<[1], [0], [0], [1], [0, 0, 1, 1], [], []>} : vector<32x16xf32>, vector<16x16xf32>, vector<32x16xf32> -> vector<32x16xf32>
    %71 = arith.mulf %70, %70 : vector<32x16xf32>
    %72 = arith.addf %62, %71 : vector<32x16xf32>
    %c0_43 = arith.constant 0 : index
    %c0_44 = arith.constant 0 : index
    %73 = vector.load %arg10[%c0_43, %c0_44] : memref<1x16xf32, #tpu.memory_space<vmem>>, vector<1x16xf32>
    %74 = vector.broadcast %73 : vector<1x16xf32> to vector<32x16xf32>
    %75 = arith.mulf %68, %74 : vector<32x16xf32>
    %cst_45 = arith.constant dense<0.000000e+00> : vector<32xf32>
    %76 = vector.multi_reduction <add>, %75, %cst_45 [1] : vector<32x16xf32> to vector<32xf32>
    %77 = vector.shape_cast %76 : vector<32xf32> to vector<32x1xf32>
    %78 = math.sqrt %72 : vector<32x16xf32>
    %c0_46 = arith.constant 0 : index
    %c0_47 = arith.constant 0 : index
    %79 = vector.load %arg11[%c0_46, %c0_47] : memref<16x16xf32, #tpu.memory_space<vmem>>, vector<16x16xf32>
    %cst_48 = arith.constant dense<0.000000e+00> : vector<32x16xf32>
    %80 = tpu.matmul %47, %79, %cst_48 {dimension_numbers = #tpu.dot_dimension_numbers<[1], [0], [0], [1], [0, 0, 1, 1], [], []>} : vector<32x16xf32>, vector<16x16xf32>, vector<32x16xf32> -> vector<32x16xf32>
    %c0_49 = arith.constant 0 : index
    %c0_50 = arith.constant 0 : index
    %81 = vector.load %arg12[%c0_49, %c0_50] : memref<16x16xf32, #tpu.memory_space<vmem>>, vector<16x16xf32>
    %cst_51 = arith.constant dense<0.000000e+00> : vector<32x16xf32>
    %82 = tpu.matmul %78, %81, %cst_51 {dimension_numbers = #tpu.dot_dimension_numbers<[1], [0], [0], [1], [0, 0, 1, 1], [], []>} : vector<32x16xf32>, vector<16x16xf32>, vector<32x16xf32> -> vector<32x16xf32>
    %83 = arith.addf %80, %82 : vector<32x16xf32>
    %c0_52 = arith.constant 0 : index
    %c0_53 = arith.constant 0 : index
    %84 = vector.load %arg13[%c0_52, %c0_53] : memref<1x16xf32, #tpu.memory_space<vmem>>, vector<1x16xf32>
    %85 = vector.broadcast %84 : vector<1x16xf32> to vector<32x16xf32>
    %86 = arith.addf %83, %85 : vector<32x16xf32>
    %87 = arith.negf %86 : vector<32x16xf32>
    %88 = math.exp %87 : vector<32x16xf32>
    %cst_54 = arith.constant 1.000000e+00 : f32
    %89 = vector.broadcast %cst_54 : f32 to vector<32x16xf32>
    %90 = arith.addf %89, %88 : vector<32x16xf32>
    %91 = arith.divf %89, %90 : vector<32x16xf32>
    %92 = arith.mulf %86, %91 : vector<32x16xf32>
    %c0_55 = arith.constant 0 : index
    %c0_56 = arith.constant 0 : index
    %93 = vector.load %arg14[%c0_55, %c0_56] : memref<1x16xf32, #tpu.memory_space<vmem>>, vector<1x16xf32>
    %94 = vector.broadcast %93 : vector<1x16xf32> to vector<32x16xf32>
    %95 = arith.mulf %92, %94 : vector<32x16xf32>
    %cst_57 = arith.constant dense<0.000000e+00> : vector<32xf32>
    %96 = vector.multi_reduction <add>, %95, %cst_57 [1] : vector<32x16xf32> to vector<32xf32>
    %97 = vector.shape_cast %96 : vector<32xf32> to vector<32x1xf32>
    %c0_58 = arith.constant 0 : index
    %c0_59 = arith.constant 0 : index
    %98 = vector.load %arg15[%c0_58, %c0_59] : memref<1x1xf32, #tpu.memory_space<vmem>>, vector<1x1xf32>
    %99 = vector.broadcast %98 : vector<1x1xf32> to vector<32x1xf32>
    %100 = arith.addf %97, %99 : vector<32x1xf32>
    %cst_60 = arith.constant 0.000000e+00 : f32
    %101 = vector.broadcast %cst_60 : f32 to vector<32x5xf32>
    %102 = arith.mulf %100, %57 : vector<32x1xf32>
    %103 = arith.mulf %100, %67 : vector<32x1xf32>
    %104 = arith.mulf %100, %77 : vector<32x1xf32>
    %105 = tpu.concatenate %102, %103, %104, %101 in 1 : vector<32x1xf32>, vector<32x1xf32>, vector<32x1xf32>, vector<32x5xf32> -> vector<32x8xf32>
    %c0_61 = arith.constant 0 : index
    %c0_62 = arith.constant 0 : index
    %106 = vector.load %arg16[%c0_61, %c0_62] : memref<32x8xf32, #tpu.memory_space<vmem>>, vector<32x8xf32>
    tpu.vector_store %arg16[%c0_61, %c0_62], %105 {strides = array<i32>} : memref<32x8xf32, #tpu.memory_space<vmem>>, vector<32x8xf32>,
    return
  }
  func.func @transform_0(%arg0: i32) -> (i32, i32) {
    %c0_i32 = arith.constant 0 : i32
    %c0_i32_0 = arith.constant 0 : i32
    return %arg0, %c0_i32 : i32, i32
  }
  func.func @transform_1(%arg0: i32) -> (i32, i32) {
    %c0_i32 = arith.constant 0 : i32
    %c0_i32_0 = arith.constant 0 : i32
    return %arg0, %c0_i32 : i32, i32
  }
  func.func @transform_2(%arg0: i32) -> (i32, i32) {
    %c0_i32 = arith.constant 0 : i32
    %c0_i32_0 = arith.constant 0 : i32
    %c0_i32_1 = arith.constant 0 : i32
    return %c0_i32, %c0_i32_0 : i32, i32
  }
  func.func @transform_3(%arg0: i32) -> (i32, i32) {
    %c0_i32 = arith.constant 0 : i32
    %c0_i32_0 = arith.constant 0 : i32
    %c0_i32_1 = arith.constant 0 : i32
    return %c0_i32, %c0_i32_0 : i32, i32
  }
  func.func @transform_4(%arg0: i32) -> (i32, i32) {
    %c0_i32 = arith.constant 0 : i32
    %c0_i32_0 = arith.constant 0 : i32
    %c0_i32_1 = arith.constant 0 : i32
    return %c0_i32, %c0_i32_0 : i32, i32
  }
  func.func @transform_5(%arg0: i32) -> (i32, i32) {
    %c0_i32 = arith.constant 0 : i32
    %c0_i32_0 = arith.constant 0 : i32
    %c0_i32_1 = arith.constant 0 : i32
    return %c0_i32, %c0_i32_0 : i32, i32
  }
  func.func @transform_6(%arg0: i32) -> (i32, i32) {
    %c0_i32 = arith.constant 0 : i32
    %c0_i32_0 = arith.constant 0 : i32
    %c0_i32_1 = arith.constant 0 : i32
    return %c0_i32, %c0_i32_0 : i32, i32
  }
  func.func @transform_7(%arg0: i32) -> (i32, i32) {
    %c0_i32 = arith.constant 0 : i32
    %c0_i32_0 = arith.constant 0 : i32
    %c0_i32_1 = arith.constant 0 : i32
    return %c0_i32, %c0_i32_0 : i32, i32
  }
  func.func @transform_8(%arg0: i32) -> (i32, i32) {
    %c0_i32 = arith.constant 0 : i32
    %c0_i32_0 = arith.constant 0 : i32
    %c0_i32_1 = arith.constant 0 : i32
    return %c0_i32, %c0_i32_0 : i32, i32
  }
  func.func @transform_9(%arg0: i32) -> (i32, i32) {
    %c0_i32 = arith.constant 0 : i32
    %c0_i32_0 = arith.constant 0 : i32
    %c0_i32_1 = arith.constant 0 : i32
    return %c0_i32, %c0_i32_0 : i32, i32
  }
  func.func @transform_10(%arg0: i32) -> (i32, i32) {
    %c0_i32 = arith.constant 0 : i32
    %c0_i32_0 = arith.constant 0 : i32
    %c0_i32_1 = arith.constant 0 : i32
    return %c0_i32, %c0_i32_0 : i32, i32
  }
  func.func @transform_11(%arg0: i32) -> (i32, i32) {
    %c0_i32 = arith.constant 0 : i32
    %c0_i32_0 = arith.constant 0 : i32
    %c0_i32_1 = arith.constant 0 : i32
    return %c0_i32, %c0_i32_0 : i32, i32
  }
  func.func @transform_12(%arg0: i32) -> (i32, i32) {
    %c0_i32 = arith.constant 0 : i32
    %c0_i32_0 = arith.constant 0 : i32
    %c0_i32_1 = arith.constant 0 : i32
    return %c0_i32, %c0_i32_0 : i32, i32
  }
  func.func @transform_13(%arg0: i32) -> (i32, i32) {
    %c0_i32 = arith.constant 0 : i32
    %c0_i32_0 = arith.constant 0 : i32
    %c0_i32_1 = arith.constant 0 : i32
    return %c0_i32, %c0_i32_0 : i32, i32
  }
  func.func @transform_14(%arg0: i32) -> (i32, i32) {
    %c0_i32 = arith.constant 0 : i32
    %c0_i32_0 = arith.constant 0 : i32
    %c0_i32_1 = arith.constant 0 : i32
    return %c0_i32, %c0_i32_0 : i32, i32
  }
  func.func @transform_15(%arg0: i32) -> (i32, i32) {
    %c0_i32 = arith.constant 0 : i32
    %c0_i32_0 = arith.constant 0 : i32
    return %arg0, %c0_i32 : i32, i32
  }
}

</mosaic_0001>

<llo_original>
// kernel: tpu_custom_call.1
$region0: #{tpu_custom_call.1}
  #allocation0 [shape = 'u32[]', space=smem, size = 0x4, offset = 0x4, fixed_abs, tag = 'smem constant byte address 0x4 - core index']
  #allocation1 [shape = 'u32[144,128]{1,0:T(1,128)}', space=vmem, size = 0x12000, scoped, tag = 'internal scratch']
  #allocation2 [shape = 'f32[1,1]{1,0:T(1,128)S(1)}', space=vmem, size = 0x200, scoped, tag = 'scoped memory for tpu_custom_call.1']
  %s0 = inlined_call_operand.vmem [shape: f32[64,32], index: 0, kind: input, shape index: {}]
  %s1 = inlined_call_operand.vmem [shape: f32[64,96], index: 1, kind: input, shape index: {}]
  %s2 = inlined_call_operand.vmem [shape: f32[32,48], index: 2, kind: input, shape index: {}]
  %s3 = inlined_call_operand.hbm [shape: f32[32,32], index: 3, kind: input, shape index: {}]
  %s4 = inlined_call_operand.hbm [shape: f32[32,32], index: 4, kind: input, shape index: {}]
  %s5 = inlined_call_operand.hbm [shape: f32[1,32], index: 5, kind: input, shape index: {}]
  %s6 = inlined_call_operand.hbm [shape: f32[32,32], index: 6, kind: input, shape index: {}]
  %s7 = inlined_call_operand.hbm [shape: f32[1,32], index: 7, kind: input, shape index: {}]
  %s8 = inlined_call_operand.vmem [shape: f32[16,16], index: 8, kind: input, shape index: {}]
  %s9 = inlined_call_operand.vmem [shape: f32[1,16], index: 9, kind: input, shape index: {}]
  %s10 = inlined_call_operand.hbm [shape: f32[16,16], index: 10, kind: input, shape index: {}]
  %s11 = inlined_call_operand.hbm [shape: f32[16,16], index: 11, kind: input, shape index: {}]
  %s12 = inlined_call_operand.vmem [shape: f32[1,16], index: 12, kind: input, shape index: {}]
  %s13 = inlined_call_operand.vmem [shape: f32[1,16], index: 13, kind: input, shape index: {}]
  %s14 = inlined_call_operand.<no memory space> [shape: f32[1,1], index: 14, kind: input, shape index: {}]
  %s15 = inlined_call_operand.vmem [shape: f32[64,8], index: 15, kind: output, shape index: {}]
  %s16 = sld [smem:[#allocation0]]
  $region121: #{tpu_custom_call.1} parent=0
    _
  %s18 = ssub.s32 1, %s16
  %s19 = scalar_select 0, %s18, %s16
  %v20 = vstv %s14
  %21 = vst [vmem:[#allocation2] sm:$0x1] %v20
  $region1: #{tpu_custom_call.1} parent=0
    #allocation3 [shape = 'u8[16384]{0}', space=vmem, size = 0x4000, scoped, tag = 'input window, operand 3, single buffered']
    #allocation4 [shape = 's32[2]{0}', space=sflag, size = 0x8, scoped, tag = 'scoped memory for tpu_custom_call.1']
    #allocation5 [shape = 'u8[16384]{0}', space=vmem, size = 0x4000, scoped, tag = 'input window, operand 4, single buffered']
    #allocation6 [shape = 's32[1]{0}', space=sflag, size = 0x4, scoped, tag = 'scoped memory for tpu_custom_call.1']
    #allocation7 [shape = 'u8[512]{0}', space=vmem, size = 0x400, scoped, tag = 'input window, operand 5, single buffered']
    #allocation8 [shape = 'u8[16384]{0}', space=vmem, size = 0x4000, scoped, tag = 'input window, operand 6, single buffered']
    #allocation9 [shape = 's32[1]{0}', space=sflag, size = 0x4, scoped, tag = 'scoped memory for tpu_custom_call.1']
    #allocation10 [shape = 'u8[512]{0}', space=vmem, size = 0x400, scoped, tag = 'input window, operand 7, single buffered']
    #allocation11 [shape = 'u8[8192]{0}', space=vmem, size = 0x2000, scoped, tag = 'input window, operand 10, single buffered']
    #allocation12 [shape = 's32[1]{0}', space=sflag, size = 0x4, scoped, tag = 'scoped memory for tpu_custom_call.1']
    #allocation13 [shape = 'u8[8192]{0}', space=vmem, size = 0x2000, scoped, tag = 'input window, operand 11, single buffered']
    %22 = vsyncpa [#allocation4], 0
    %23 = vsyncpa [#allocation6], 0
    %24 = vsyncpa [#allocation9], 0
    %25 = vsyncpa [#allocation12], 0
    loop: start=0, step=1, limit=4
    $region2: #{tpu_custom_call.1} parent=1 // loop_pre_header
      _
    $region3: #{tpu_custom_call.1} parent=1 // loop_header
      %s27 = sphi 0, %s31
      %p28 = scmp.ge.s32.totalorder %s27, 4
      %s37 = sphi 0, %s39
      %s40 = sphi 0, %s37
      %s41 = sphi 0, %s40
      %s57 = sphi 0, %s41
      %s63 = sphi 0, %s65
      %s66 = sphi 0, %s63
      %s67 = sphi 0, %s66
      %s83 = sphi 0, %s67
      %s87 = sphi 0, %s87
      %s89 = sphi 0, %s87
      %s90 = sphi 0, %s89
      %s104 = sphi 0, %s90
      %s108 = sphi 0, %s108
      %s110 = sphi 0, %s108
      %s111 = sphi 0, %s110
      %s125 = sphi 0, %s111
      %s129 = sphi 0, %s129
      %s131 = sphi 0, %s129
      %s132 = sphi 0, %s131
      %s146 = sphi 0, %s132
      %s150 = sphi 0, %s150
      %s152 = sphi 0, %s150
      %s153 = sphi 0, %s152
      %s167 = sphi 0, %s153
      %s171 = sphi 0, %s171
      %s173 = sphi 0, %s171
      %s174 = sphi 0, %s173
      %s188 = sphi 0, %s174
      %s192 = sphi 0, %s192
      %s194 = sphi 0, %s192
      %s195 = sphi 0, %s194
      %s209 = sphi 0, %s195
      %s213 = sphi 0, %s213
      %s215 = sphi 0, %s213
      %s216 = sphi 0, %s215
      %s230 = sphi 0, %s216
      %s234 = sphi 0, %s234
      %s236 = sphi 0, %s234
      %s237 = sphi 0, %s236
      %s251 = sphi 0, %s237
      %s255 = sphi 0, %s255
      %s257 = sphi 0, %s255
      %s258 = sphi 0, %s257
      %s272 = sphi 0, %s258
      %s276 = sphi 0, %s276
      %s278 = sphi 0, %s276
      %s279 = sphi 0, %s278
      %s293 = sphi 0, %s279
      %s297 = sphi 0, %s297
      %s299 = sphi 0, %s297
      %s300 = sphi 0, %s299
      %s314 = sphi 0, %s300
      %s318 = sphi 0, %s318
      %s320 = sphi 0, %s318
      %s321 = sphi 0, %s320
      %s335 = sphi 0, %s321
      %s339 = sphi 0, %s339
      %s341 = sphi 0, %s339
      %s342 = sphi 0, %s341
      %s356 = sphi 0, %s342
      %s362 = sphi 0, %s364
      %s365 = sphi 0, %s362
      %s366 = sphi 0, %s365
      %s382 = sphi 0, %s366
    $region4: #{tpu_custom_call.1} parent=1 // loop_header_branch
      %30 = sbr.rel (%p28) target = $region8
    $region5: #{tpu_custom_call.1} parent=1 // loop_body
      %s32 = ssub.s32 %s27, 1
      %s33 = ssub.s32 %s27, 2
      %s34 = sadd.s32 %s27, 1
      %s35 = ssub.s32 %s27, %s34
      %p36 = scmp.eq.s32.totalorder %s35, 0
      %s38 = sadd.s32 %s37, 1
      %s39 = scalar_select %p36, %s37, %s38
      %p42 = pneg %p36
      %p43 = scmp.eq.s32.totalorder %s27, 1
      %p44 = por %p42, %p43
      %p45 = scmp.ne.s32.totalorder %s37, %s40
      %p46 = scmp.eq.s32.totalorder %s27, 0
      %p47 = por %p45, %p46
      %p48 = scmp.ne.s32.totalorder %s37, %s40
      %p49 = scmp.eq.s32.totalorder %s32, 1
      %p50 = por %p48, %p49
      %p51 = scmp.ne.s32.totalorder %s40, %s41
      %p52 = scmp.eq.s32.totalorder %s32, 0
      %p53 = por %p51, %p52
      %p54 = scmp.ne.s32.totalorder %s40, %s41
      %p55 = scmp.eq.s32.totalorder %s33, 1
      %p56 = por %p54, %p55
      %p58 = scmp.ne.s32.totalorder %s41, %s57
      %p59 = scmp.eq.s32.totalorder %s33, 0
      %p60 = por %p58, %p59
      %s61 = ssub.s32 %s27, %s34
      %p62 = scmp.eq.s32.totalorder %s61, 0
      %s64 = sadd.s32 %s63, 1
      %s65 = scalar_select %p62, %s63, %s64
      %p68 = pneg %p62
      %p69 = scmp.eq.s32.totalorder %s27, 1
      %p70 = por %p68, %p69
      %p71 = scmp.ne.s32.totalorder %s63, %s66
      %p72 = scmp.eq.s32.totalorder %s27, 0
      %p73 = por %p71, %p72
      %p74 = scmp.ne.s32.totalorder %s63, %s66
      %p75 = scmp.eq.s32.totalorder %s32, 1
      %p76 = por %p74, %p75
      %p77 = scmp.ne.s32.totalorder %s66, %s67
      %p78 = scmp.eq.s32.totalorder %s32, 0
      %p79 = por %p77, %p78
      %p80 = scmp.ne.s32.totalorder %s66, %s67
      %p81 = scmp.eq.s32.totalorder %s33, 1
      %p82 = por %p80, %p81
      %p84 = scmp.ne.s32.totalorder %s67, %s83
      %p85 = scmp.eq.s32.totalorder %s33, 0
      %p86 = por %p84, %p85
      %s88 = sadd.s32 %s87, 1
      %p91 = scmp.eq.s32.totalorder %s27, 1
      %p92 = scmp.ne.s32.totalorder %s87, %s89
      %p93 = scmp.eq.s32.totalorder %s27, 0
      %p94 = por %p92, %p93
      %p95 = scmp.ne.s32.totalorder %s87, %s89
      %p96 = scmp.eq.s32.totalorder %s32, 1
      %p97 = por %p95, %p96
      %p98 = scmp.ne.s32.totalorder %s89, %s90
      %p99 = scmp.eq.s32.totalorder %s32, 0
      %p100 = por %p98, %p99
      %p101 = scmp.ne.s32.totalorder %s89, %s90
      %p102 = scmp.eq.s32.totalorder %s33, 1
      %p103 = por %p101, %p102
      %p105 = scmp.ne.s32.totalorder %s90, %s104
      %p106 = scmp.eq.s32.totalorder %s33, 0
      %p107 = por %p105, %p106
      %s109 = sadd.s32 %s108, 1
      %p112 = scmp.eq.s32.totalorder %s27, 1
      %p113 = scmp.ne.s32.totalorder %s108, %s110
      %p114 = scmp.eq.s32.totalorder %s27, 0
      %p115 = por %p113, %p114
      %p116 = scmp.ne.s32.totalorder %s108, %s110
      %p117 = scmp.eq.s32.totalorder %s32, 1
      %p118 = por %p116, %p117
      %p119 = scmp.ne.s32.totalorder %s110, %s111
      %p120 = scmp.eq.s32.totalorder %s32, 0
      %p121 = por %p119, %p120
      %p122 = scmp.ne.s32.totalorder %s110, %s111
      %p123 = scmp.eq.s32.totalorder %s33, 1
      %p124 = por %p122, %p123
      %p126 = scmp.ne.s32.totalorder %s111, %s125
      %p127 = scmp.eq.s32.totalorder %s33, 0
      %p128 = por %p126, %p127
      %s130 = sadd.s32 %s129, 1
      %p133 = scmp.eq.s32.totalorder %s27, 1
      %p134 = scmp.ne.s32.totalorder %s129, %s131
      %p135 = scmp.eq.s32.totalorder %s27, 0
      %p136 = por %p134, %p135
      %p137 = scmp.ne.s32.totalorder %s129, %s131
      %p138 = scmp.eq.s32.totalorder %s32, 1
      %p139 = por %p137, %p138
      %p140 = scmp.ne.s32.totalorder %s131, %s132
      %p141 = scmp.eq.s32.totalorder %s32, 0
      %p142 = por %p140, %p141
      %p143 = scmp.ne.s32.totalorder %s131, %s132
      %p144 = scmp.eq.s32.totalorder %s33, 1
      %p145 = por %p143, %p144
      %p147 = scmp.ne.s32.totalorder %s132, %s146
      %p148 = scmp.eq.s32.totalorder %s33, 0
      %p149 = por %p147, %p148
      %s151 = sadd.s32 %s150, 1
      %p154 = scmp.eq.s32.totalorder %s27, 1
      %p155 = scmp.ne.s32.totalorder %s150, %s152
      %p156 = scmp.eq.s32.totalorder %s27, 0
      %p157 = por %p155, %p156
      %p158 = scmp.ne.s32.totalorder %s150, %s152
      %p159 = scmp.eq.s32.totalorder %s32, 1
      %p160 = por %p158, %p159
      %p161 = scmp.ne.s32.totalorder %s152, %s153
      %p162 = scmp.eq.s32.totalorder %s32, 0
      %p163 = por %p161, %p162
      %p164 = scmp.ne.s32.totalorder %s152, %s153
      %p165 = scmp.eq.s32.totalorder %s33, 1
      %p166 = por %p164, %p165
      %p168 = scmp.ne.s32.totalorder %s153, %s167
      %p169 = scmp.eq.s32.totalorder %s33, 0
      %p170 = por %p168, %p169
      %s172 = sadd.s32 %s171, 1
      %p175 = scmp.eq.s32.totalorder %s27, 1
      %p176 = scmp.ne.s32.totalorder %s171, %s173
      %p177 = scmp.eq.s32.totalorder %s27, 0
      %p178 = por %p176, %p177
      %p179 = scmp.ne.s32.totalorder %s171, %s173
      %p180 = scmp.eq.s32.totalorder %s32, 1
      %p181 = por %p179, %p180
      %p182 = scmp.ne.s32.totalorder %s173, %s174
      %p183 = scmp.eq.s32.totalorder %s32, 0
      %p184 = por %p182, %p183
      %p185 = scmp.ne.s32.totalorder %s173, %s174
      %p186 = scmp.eq.s32.totalorder %s33, 1
      %p187 = por %p185, %p186
      %p189 = scmp.ne.s32.totalorder %s174, %s188
      %p190 = scmp.eq.s32.totalorder %s33, 0
      %p191 = por %p189, %p190
      %s193 = sadd.s32 %s192, 1
      %p196 = scmp.eq.s32.totalorder %s27, 1
      %p197 = scmp.ne.s32.totalorder %s192, %s194
      %p198 = scmp.eq.s32.totalorder %s27, 0
      %p199 = por %p197, %p198
      %p200 = scmp.ne.s32.totalorder %s192, %s194
      %p201 = scmp.eq.s32.totalorder %s32, 1
      %p202 = por %p200, %p201
      %p203 = scmp.ne.s32.totalorder %s194, %s195
      %p204 = scmp.eq.s32.totalorder %s32, 0
      %p205 = por %p203, %p204
      %p206 = scmp.ne.s32.totalorder %s194, %s195
      %p207 = scmp.eq.s32.totalorder %s33, 1
      %p208 = por %p206, %p207
      %p210 = scmp.ne.s32.totalorder %s195, %s209
      %p211 = scmp.eq.s32.totalorder %s33, 0
      %p212 = por %p210, %p211
      %s214 = sadd.s32 %s213, 1
      %p217 = scmp.eq.s32.totalorder %s27, 1
      %p218 = scmp.ne.s32.totalorder %s213, %s215
      %p219 = scmp.eq.s32.totalorder %s27, 0
      %p220 = por %p218, %p219
      %p221 = scmp.ne.s32.totalorder %s213, %s215
      %p222 = scmp.eq.s32.totalorder %s32, 1
      %p223 = por %p221, %p222
      %p224 = scmp.ne.s32.totalorder %s215, %s216
      %p225 = scmp.eq.s32.totalorder %s32, 0
      %p226 = por %p224, %p225
      %p227 = scmp.ne.s32.totalorder %s215, %s216
      %p228 = scmp.eq.s32.totalorder %s33, 1
      %p229 = por %p227, %p228
      %p231 = scmp.ne.s32.totalorder %s216, %s230
      %p232 = scmp.eq.s32.totalorder %s33, 0
      %p233 = por %p231, %p232
      %s235 = sadd.s32 %s234, 1
      %p238 = scmp.eq.s32.totalorder %s27, 1
      %p239 = scmp.ne.s32.totalorder %s234, %s236
      %p240 = scmp.eq.s32.totalorder %s27, 0
      %p241 = por %p239, %p240
      %p242 = scmp.ne.s32.totalorder %s234, %s236
      %p243 = scmp.eq.s32.totalorder %s32, 1
      %p244 = por %p242, %p243
      %p245 = scmp.ne.s32.totalorder %s236, %s237
      %p246 = scmp.eq.s32.totalorder %s32, 0
      %p247 = por %p245, %p246
      %p248 = scmp.ne.s32.totalorder %s236, %s237
      %p249 = scmp.eq.s32.totalorder %s33, 1
      %p250 = por %p248, %p249
      %p252 = scmp.ne.s32.totalorder %s237, %s251
      %p253 = scmp.eq.s32.totalorder %s33, 0
      %p254 = por %p252, %p253
      %s256 = sadd.s32 %s255, 1
      %p259 = scmp.eq.s32.totalorder %s27, 1
      %p260 = scmp.ne.s32.totalorder %s255, %s257
      %p261 = scmp.eq.s32.totalorder %s27, 0
      %p262 = por %p260, %p261
      %p263 = scmp.ne.s32.totalorder %s255, %s257
      %p264 = scmp.eq.s32.totalorder %s32, 1
      %p265 = por %p263, %p264
      %p266 = scmp.ne.s32.totalorder %s257, %s258
      %p267 = scmp.eq.s32.totalorder %s32, 0
      %p268 = por %p266, %p267
      %p269 = scmp.ne.s32.totalorder %s257, %s258
      %p270 = scmp.eq.s32.totalorder %s33, 1
      %p271 = por %p269, %p270
      %p273 = scmp.ne.s32.totalorder %s258, %s272
      %p274 = scmp.eq.s32.totalorder %s33, 0
      %p275 = por %p273, %p274
      %s277 = sadd.s32 %s276, 1
      %p280 = scmp.eq.s32.totalorder %s27, 1
      %p281 = scmp.ne.s32.totalorder %s276, %s278
      %p282 = scmp.eq.s32.totalorder %s27, 0
      %p283 = por %p281, %p282
      %p284 = scmp.ne.s32.totalorder %s276, %s278
      %p285 = scmp.eq.s32.totalorder %s32, 1
      %p286 = por %p284, %p285
      %p287 = scmp.ne.s32.totalorder %s278, %s279
      %p288 = scmp.eq.s32.totalorder %s32, 0
      %p289 = por %p287, %p288
      %p290 = scmp.ne.s32.totalorder %s278, %s279
      %p291 = scmp.eq.s32.totalorder %s33, 1
      %p292 = por %p290, %p291
      %p294 = scmp.ne.s32.totalorder %s279, %s293
      %p295 = scmp.eq.s32.totalorder %s33, 0
      %p296 = por %p294, %p295
      %s298 = sadd.s32 %s297, 1
      %p301 = scmp.eq.s32.totalorder %s27, 1
      %p302 = scmp.ne.s32.totalorder %s297, %s299
      %p303 = scmp.eq.s32.totalorder %s27, 0
      %p304 = por %p302, %p303
      %p305 = scmp.ne.s32.totalorder %s297, %s299
      %p306 = scmp.eq.s32.totalorder %s32, 1
      %p307 = por %p305, %p306
      %p308 = scmp.ne.s32.totalorder %s299, %s300
      %p309 = scmp.eq.s32.totalorder %s32, 0
      %p310 = por %p308, %p309
      %p311 = scmp.ne.s32.totalorder %s299, %s300
      %p312 = scmp.eq.s32.totalorder %s33, 1
      %p313 = por %p311, %p312
      %p315 = scmp.ne.s32.totalorder %s300, %s314
      %p316 = scmp.eq.s32.totalorder %s33, 0
      %p317 = por %p315, %p316
      %s319 = sadd.s32 %s318, 1
      %p322 = scmp.eq.s32.totalorder %s27, 1
      %p323 = scmp.ne.s32.totalorder %s318, %s320
      %p324 = scmp.eq.s32.totalorder %s27, 0
      %p325 = por %p323, %p324
      %p326 = scmp.ne.s32.totalorder %s318, %s320
      %p327 = scmp.eq.s32.totalorder %s32, 1
      %p328 = por %p326, %p327
      %p329 = scmp.ne.s32.totalorder %s320, %s321
      %p330 = scmp.eq.s32.totalorder %s32, 0
      %p331 = por %p329, %p330
      %p332 = scmp.ne.s32.totalorder %s320, %s321
      %p333 = scmp.eq.s32.totalorder %s33, 1
      %p334 = por %p332, %p333
      %p336 = scmp.ne.s32.totalorder %s321, %s335
      %p337 = scmp.eq.s32.totalorder %s33, 0
      %p338 = por %p336, %p337
      %s340 = sadd.s32 %s339, 1
      %p343 = scmp.eq.s32.totalorder %s27, 1
      %p344 = scmp.ne.s32.totalorder %s339, %s341
      %p345 = scmp.eq.s32.totalorder %s27, 0
      %p346 = por %p344, %p345
      %p347 = scmp.ne.s32.totalorder %s339, %s341
      %p348 = scmp.eq.s32.totalorder %s32, 1
      %p349 = por %p347, %p348
      %p350 = scmp.ne.s32.totalorder %s341, %s342
      %p351 = scmp.eq.s32.totalorder %s32, 0
      %p352 = por %p350, %p351
      %p353 = scmp.ne.s32.totalorder %s341, %s342
      %p354 = scmp.eq.s32.totalorder %s33, 1
      %p355 = por %p353, %p354
      %p357 = scmp.ne.s32.totalorder %s342, %s356
      %p358 = scmp.eq.s32.totalorder %s33, 0
      %p359 = por %p357, %p358
      %s360 = ssub.s32 %s27, %s34
      %p361 = scmp.eq.s32.totalorder %s360, 0
      %s363 = sadd.s32 %s362, 1
      %s364 = scalar_select %p361, %s362, %s363
      %p367 = pneg %p361
      %p368 = scmp.eq.s32.totalorder %s27, 1
      %p369 = por %p367, %p368
      %p370 = scmp.ne.s32.totalorder %s362, %s365
      %p371 = scmp.eq.s32.totalorder %s27, 0
      %p372 = por %p370, %p371
      %p373 = scmp.ne.s32.totalorder %s362, %s365
      %p374 = scmp.eq.s32.totalorder %s32, 1
      %p375 = por %p373, %p374
      %p376 = scmp.ne.s32.totalorder %s365, %s366
      %p377 = scmp.eq.s32.totalorder %s32, 0
      %p378 = por %p376, %p377
      %p379 = scmp.ne.s32.totalorder %s365, %s366
      %p380 = scmp.eq.s32.totalorder %s33, 1
      %p381 = por %p379, %p380
      %p383 = scmp.ne.s32.totalorder %s366, %s382
      %p384 = scmp.eq.s32.totalorder %s33, 0
      %p385 = por %p383, %p384
      %p386 = scmp.le.s32.totalorder 1, %s27
      %p387 = scmp.lt.s32.totalorder %s27, 3
      %p388 = pnand %p386, %p387
      %p389 = pneg %p388
      // Predicated region
      $region9: #{tpu_custom_call.1} parent=5 // pred_check
        _
      $region10: #{tpu_custom_call.1} parent=5 // pred_check_branch
        %391 = sbr.rel (%p388) target = $region12
      $region11: #{tpu_custom_call.1} parent=5 // pred_region
        %s392 = ssub.s32 %s27, 1
        // Predicated region
        $region13: #{tpu_custom_call.1} parent=11 // pred_check
          %p393 = pneg %p100
        $region14: #{tpu_custom_call.1} parent=11 // pred_check_branch
          %395 = sbr.rel (%p393) target = $region16
        $region15: #{tpu_custom_call.1} parent=11 // pred_region
          _
        $region16: #{tpu_custom_call.1} parent=11 // pred_fallthru
          _
        // Predicated region
        $region17: #{tpu_custom_call.1} parent=11 // pred_check
          %p396 = pneg %p121
        $region18: #{tpu_custom_call.1} parent=11 // pred_check_branch
          %398 = sbr.rel (%p396) target = $region20
        $region19: #{tpu_custom_call.1} parent=11 // pred_region
          %s400 = ssub.s32 512, 512
          %401 = vsyncadd [#allocation4], %s400
          %s402 = sshll.u32 [#allocation3], 4
          %s403 = int_to_ptr.vmem [resolvable:$true] %s402
          %408 = dma.hbm_to_vmem [thread:$0]  %s3, 512, %s403, [#allocation4], 128, 128, 8
        $region20: #{tpu_custom_call.1} parent=11 // pred_fallthru
          _
        // Predicated region
        $region21: #{tpu_custom_call.1} parent=11 // pred_check
          %p409 = pneg %p142
        $region22: #{tpu_custom_call.1} parent=11 // pred_check_branch
          %411 = sbr.rel (%p409) target = $region24
        $region23: #{tpu_custom_call.1} parent=11 // pred_region
          %s413 = ssub.s32 512, 512
          %414 = vsyncadd [#allocation6], %s413
          %s415 = sshll.u32 [#allocation5], 4
          %s416 = int_to_ptr.vmem [resolvable:$true] %s415
          %421 = dma.hbm_to_vmem [thread:$0]  %s4, 512, %s416, [#allocation6], 128, 128, 8
        $region24: #{tpu_custom_call.1} parent=11 // pred_fallthru
          _
        // Predicated region
        $region25: #{tpu_custom_call.1} parent=11 // pred_check
          %p422 = pneg %p163
        $region26: #{tpu_custom_call.1} parent=11 // pred_check_branch
          %424 = sbr.rel (%p422) target = $region28
        $region27: #{tpu_custom_call.1} parent=11 // pred_region
          %s426 = ssub.s32 16, 16
          %427 = vsyncadd [#allocation6], %s426
          %s429 = sshll.u32 [#allocation7], 4
          %s430 = int_to_ptr.vmem [resolvable:$true] %s429
          %432 = dma.hbm_to_vmem [thread:$0]  %s5, 16, %s430, [#allocation6]
        $region28: #{tpu_custom_call.1} parent=11 // pred_fallthru
          _
        // Predicated region
        $region29: #{tpu_custom_call.1} parent=11 // pred_check
          %p433 = pneg %p184
        $region30: #{tpu_custom_call.1} parent=11 // pred_check_branch
          %435 = sbr.rel (%p433) target = $region32
        $region31: #{tpu_custom_call.1} parent=11 // pred_region
          %s437 = ssub.s32 512, 512
          %438 = vsyncadd [#allocation9], %s437
          %s439 = sshll.u32 [#allocation8], 4
          %s440 = int_to_ptr.vmem [resolvable:$true] %s439
          %445 = dma.hbm_to_vmem [thread:$0]  %s6, 512, %s440, [#allocation9], 128, 128, 8
        $region32: #{tpu_custom_call.1} parent=11 // pred_fallthru
          _
        // Predicated region
        $region33: #{tpu_custom_call.1} parent=11 // pred_check
          %p446 = pneg %p205
        $region34: #{tpu_custom_call.1} parent=11 // pred_check_branch
          %448 = sbr.rel (%p446) target = $region36
        $region35: #{tpu_custom_call.1} parent=11 // pred_region
          %s450 = ssub.s32 16, 16
          %451 = vsyncadd [#allocation9], %s450
          %s453 = sshll.u32 [#allocation10], 4
          %s454 = int_to_ptr.vmem [resolvable:$true] %s453
          %456 = dma.hbm_to_vmem [thread:$0]  %s7, 16, %s454, [#allocation9]
        $region36: #{tpu_custom_call.1} parent=11 // pred_fallthru
          _
        // Predicated region
        $region37: #{tpu_custom_call.1} parent=11 // pred_check
          %p457 = pneg %p226
        $region38: #{tpu_custom_call.1} parent=11 // pred_check_branch
          %459 = sbr.rel (%p457) target = $region40
        $region39: #{tpu_custom_call.1} parent=11 // pred_region
          _
        $region40: #{tpu_custom_call.1} parent=11 // pred_fallthru
          _
        // Predicated region
        $region41: #{tpu_custom_call.1} parent=11 // pred_check
          %p460 = pneg %p247
        $region42: #{tpu_custom_call.1} parent=11 // pred_check_branch
          %462 = sbr.rel (%p460) target = $region44
        $region43: #{tpu_custom_call.1} parent=11 // pred_region
          _
        $region44: #{tpu_custom_call.1} parent=11 // pred_fallthru
          _
        // Predicated region
        $region45: #{tpu_custom_call.1} parent=11 // pred_check
          %p463 = pneg %p268
        $region46: #{tpu_custom_call.1} parent=11 // pred_check_branch
          %465 = sbr.rel (%p463) target = $region48
        $region47: #{tpu_custom_call.1} parent=11 // pred_region
          %s467 = ssub.s32 256, 256
          %468 = vsyncadd [#allocation12], %s467
          %s469 = sshll.u32 [#allocation11], 4
          %s470 = int_to_ptr.vmem [resolvable:$true] %s469
          %475 = dma.hbm_to_vmem [thread:$0]  %s10, 256, %s470, [#allocation12], 128, 128, 8
        $region48: #{tpu_custom_call.1} parent=11 // pred_fallthru
          _
        // Predicated region
        $region49: #{tpu_custom_call.1} parent=11 // pred_check
          %p476 = pneg %p289
        $region50: #{tpu_custom_call.1} parent=11 // pred_check_branch
          %478 = sbr.rel (%p476) target = $region52
        $region51: #{tpu_custom_call.1} parent=11 // pred_region
          %s480 = ssub.s32 256, 256
          %481 = vsyncadd [#allocation12], %s480
          %s482 = sshll.u32 [#allocation13], 4
          %s483 = int_to_ptr.vmem [resolvable:$true] %s482
          %488 = dma.hbm_to_vmem [thread:$0]  %s11, 256, %s483, [#allocation12], 128, 128, 8
        $region52: #{tpu_custom_call.1} parent=11 // pred_fallthru
          _
        // Predicated region
        $region53: #{tpu_custom_call.1} parent=11 // pred_check
          %p489 = pneg %p310
        $region54: #{tpu_custom_call.1} parent=11 // pred_check_branch
          %491 = sbr.rel (%p489) target = $region56
        $region55: #{tpu_custom_call.1} parent=11 // pred_region
          _
        $region56: #{tpu_custom_call.1} parent=11 // pred_fallthru
          _
        // Predicated region
        $region57: #{tpu_custom_call.1} parent=11 // pred_check
          %p492 = pneg %p331
        $region58: #{tpu_custom_call.1} parent=11 // pred_check_branch
          %494 = sbr.rel (%p492) target = $region60
        $region59: #{tpu_custom_call.1} parent=11 // pred_region
          _
        $region60: #{tpu_custom_call.1} parent=11 // pred_fallthru
          _
        // Predicated region
        $region61: #{tpu_custom_call.1} parent=11 // pred_check
          %p495 = pneg %p352
        $region62: #{tpu_custom_call.1} parent=11 // pred_check_branch
          %497 = sbr.rel (%p495) target = $region64
        $region63: #{tpu_custom_call.1} parent=11 // pred_region
          _
        $region64: #{tpu_custom_call.1} parent=11 // pred_fallthru
          _
      $region12: #{tpu_custom_call.1} parent=5 // pred_fallthru
        _
      %p498 = scmp.lt.s32.totalorder %s27, 2
      // Predicated region
      $region65: #{tpu_custom_call.1} parent=5 // pred_check
        %p499 = pneg %p498
      $region66: #{tpu_custom_call.1} parent=5 // pred_check_branch
        %501 = sbr.rel (%p499) target = $region68
      $region67: #{tpu_custom_call.1} parent=5 // pred_region
        // Predicated region
        $region69: #{tpu_custom_call.1} parent=67 // pred_check
          %p502 = pneg %p47
        $region70: #{tpu_custom_call.1} parent=67 // pred_check_branch
          %504 = sbr.rel (%p502) target = $region72
        $region71: #{tpu_custom_call.1} parent=67 // pred_region
          %s505 = smul.u32 4, %s27
          %p506 = scmp.lt.s32.totalorder %s505, 7
          %s507 = scalar_select %p506, %s505, 7
          %s508 = smul.addr %s507, 8
          %s509 = scalar_lea.vmem %s0, %s508
          %s510 = smul.u32 4, %s27
        $region72: #{tpu_custom_call.1} parent=67 // pred_fallthru
          _
        // Predicated region
        $region73: #{tpu_custom_call.1} parent=67 // pred_check
          %p511 = pneg %p73
        $region74: #{tpu_custom_call.1} parent=67 // pred_check_branch
          %513 = sbr.rel (%p511) target = $region76
        $region75: #{tpu_custom_call.1} parent=67 // pred_region
          %s514 = smul.u32 4, %s27
          %p515 = scmp.lt.s32.totalorder %s514, 7
          %s516 = scalar_select %p515, %s514, 7
          %s517 = smul.addr %s516, 8
          %s518 = scalar_lea.vmem %s1, %s517
          %s519 = smul.u32 4, %s27
        $region76: #{tpu_custom_call.1} parent=67 // pred_fallthru
          _
      $region68: #{tpu_custom_call.1} parent=5 // pred_fallthru
        _
      %p520 = scmp.le.s32.totalorder 1, %s27
      %p521 = scmp.lt.s32.totalorder %s27, 3
      %p522 = pnand %p520, %p521
      %p523 = pneg %p522
      // Predicated region
      $region77: #{tpu_custom_call.1} parent=5 // pred_check
        _
      $region78: #{tpu_custom_call.1} parent=5 // pred_check_branch
        %525 = sbr.rel (%p522) target = $region80
      $region79: #{tpu_custom_call.1} parent=5 // pred_region
        %s526 = ssub.s32 %s27, 1
        // Predicated region
        $region81: #{tpu_custom_call.1} parent=79 // pred_check
          %p527 = pneg %p121
        $region82: #{tpu_custom_call.1} parent=79 // pred_check_branch
          %529 = sbr.rel (%p527) target = $region84
        $region83: #{tpu_custom_call.1} parent=79 // pred_region
          %530 = dma.done [#allocation4], 512
        $region84: #{tpu_custom_call.1} parent=79 // pred_fallthru
          _
        // Predicated region
        $region85: #{tpu_custom_call.1} parent=79 // pred_check
          %p531 = pneg %p142
        $region86: #{tpu_custom_call.1} parent=79 // pred_check_branch
          %533 = sbr.rel (%p531) target = $region88
        $region87: #{tpu_custom_call.1} parent=79 // pred_region
          %534 = dma.done [#allocation6], 512
        $region88: #{tpu_custom_call.1} parent=79 // pred_fallthru
          _
        // Predicated region
        $region89: #{tpu_custom_call.1} parent=79 // pred_check
          %p535 = pneg %p163
        $region90: #{tpu_custom_call.1} parent=79 // pred_check_branch
          %537 = sbr.rel (%p535) target = $region92
        $region91: #{tpu_custom_call.1} parent=79 // pred_region
          %538 = dma.done [#allocation6], 16
        $region92: #{tpu_custom_call.1} parent=79 // pred_fallthru
          _
        // Predicated region
        $region93: #{tpu_custom_call.1} parent=79 // pred_check
          %p539 = pneg %p184
        $region94: #{tpu_custom_call.1} parent=79 // pred_check_branch
          %541 = sbr.rel (%p539) target = $region96
        $region95: #{tpu_custom_call.1} parent=79 // pred_region
          %542 = dma.done [#allocation9], 512
        $region96: #{tpu_custom_call.1} parent=79 // pred_fallthru
          _
        // Predicated region
        $region97: #{tpu_custom_call.1} parent=79 // pred_check
          %p543 = pneg %p205
        $region98: #{tpu_custom_call.1} parent=79 // pred_check_branch
          %545 = sbr.rel (%p543) target = $region100
        $region99: #{tpu_custom_call.1} parent=79 // pred_region
          %546 = dma.done [#allocation9], 16
        $region100: #{tpu_custom_call.1} parent=79 // pred_fallthru
          _
        // Predicated region
        $region101: #{tpu_custom_call.1} parent=79 // pred_check
          %p547 = pneg %p268
        $region102: #{tpu_custom_call.1} parent=79 // pred_check_branch
          %549 = sbr.rel (%p547) target = $region104
        $region103: #{tpu_custom_call.1} parent=79 // pred_region
          %550 = dma.done [#allocation12], 256
        $region104: #{tpu_custom_call.1} parent=79 // pred_fallthru
          _
        // Predicated region
        $region105: #{tpu_custom_call.1} parent=79 // pred_check
          %p551 = pneg %p289
        $region106: #{tpu_custom_call.1} parent=79 // pred_check_branch
          %553 = sbr.rel (%p551) target = $region108
        $region107: #{tpu_custom_call.1} parent=79 // pred_region
          %554 = dma.done [#allocation12], 256
        $region108: #{tpu_custom_call.1} parent=79 // pred_fallthru
          _
        %s555 = smul.u32 4, %s32
        %p556 = scmp.lt.s32.totalorder %s555, 7
        %s557 = scalar_select %p556, %s555, 7
        %s558 = smul.addr %s557, 8
        %s559 = scalar_lea.vmem %s0, %s558
        %p560 = pneg %p53
        %p561 = pneg %p50
        %s562 = smul.u32 4, %s32
        %p563 = scmp.lt.s32.totalorder %s562, 7
        %s564 = scalar_select %p563, %s562, 7
        %s565 = smul.addr %s564, 8
        %s566 = scalar_lea.vmem %s1, %s565
        %p567 = pneg %p79
        %p568 = pneg %p76
        %p569 = pneg %p100
        %p570 = pneg %p97
        %p571 = pneg %p121
        %p572 = pneg %p118
        %p573 = pneg %p142
        %p574 = pneg %p139
        %p575 = pneg %p163
        %p576 = pneg %p160
        %p577 = pneg %p184
        %p578 = pneg %p181
        %p579 = pneg %p205
        %p580 = pneg %p202
        %p581 = pneg %p226
        %p582 = pneg %p223
        %p583 = pneg %p247
        %p584 = pneg %p244
        %p585 = pneg %p268
        %p586 = pneg %p265
        %p587 = pneg %p289
        %p588 = pneg %p286
        %p589 = pneg %p310
        %p590 = pneg %p307
        %p591 = pneg %p331
        %p592 = pneg %p328
        %p593 = pneg %p352
        %p594 = pneg %p349
        %p595 = pneg %p378
        %p596 = pneg %p375
        %s597 = smul.u32 4, %s32
        %p598 = scmp.lt.s32.totalorder %s597, 7
        %s599 = scalar_select %p598, %s597, 7
        %s600 = smul.addr %s599, 8
        %s601 = scalar_lea.vmem %s15, %s600
        %s602 = smul.u32 4, %s32
        %p603 = scmp.lt.s32.totalorder %s602, 7
        %s604 = scalar_select %p603, %s602, 7
        %s605 = smul.addr %s604, 8
        %s606 = scalar_lea.vmem %s0, %s605
        %s607 = smul.u32 4, %s32
        %s608 = smul.u32 4, %s32
        %p609 = scmp.lt.s32.totalorder %s608, 7
        %s610 = scalar_select %p609, %s608, 7
        %s611 = smul.addr %s610, 8
        %s612 = scalar_lea.vmem %s1, %s611
        %s613 = smul.u32 4, %s32
        %s614 = smul.u32 4, %s32
        %p615 = scmp.lt.s32.totalorder %s614, 7
        %s616 = scalar_select %p615, %s614, 7
        %s617 = smul.addr %s616, 8
        %s618 = scalar_lea.vmem %s15, %s617
        %s619 = smul.u32 4, %s32
        %v620 = vld [vmem:[%s606] sm:$0xff]
        %v621 = vld [vmem:[%s606 + $0x8] sm:$0xff]
        %v622 = vld [vmem:[%s606 + $0x10] sm:$0xff]
        %v623 = vld [vmem:[%s606 + $0x18] sm:$0xff]
        %v624 = vld [vmem:[%s612] sm:$0xff]
        %v625 = vld [vmem:[%s612 + $0x8] sm:$0xff]
        %v626 = vld [vmem:[%s612 + $0x10] sm:$0xff]
        %v627 = vld [vmem:[%s612 + $0x18] sm:$0xff]
        %v628 = vld [vmem:[%s2] sm:$0xff]
        %v629 = vld [vmem:[%s2 + $0x8] sm:$0xff]
        %v630 = vld [vmem:[%s2 + $0x10] sm:$0xff]
        %v631 = vld [vmem:[%s2 + $0x18] sm:$0xff]
        %vm632 = vcmask 261120
        %v634 = vsel %vm632, %v624, 0
        %v637 = vsel %vm632, %v625, 0
        %v640 = vsel %vm632, %v626, 0
        %v643 = vsel %vm632, %v627, 0
        %645 = vmatprep.subr.mxu0 0.0
        %646 = vmatpush1.msra.mxu0 0.0
        %647 = vmatprep.subr.mxu0 0.0
        %648 = vmatpush1.msra.mxu0 0.0
        %649 = vmatprep.subr.mxu0 0.0
        %650 = vmatpush1.msra.mxu0 0.0
        %651 = vmatprep.subr.mxu0 0.0
        %652 = vmatpush1.msra.mxu0 0.0
        %653 = vmatprep.subr.mxu0 0.0
        %654 = vmatpush1.msra.mxu0 0.0
        %655 = vmatprep.subr.mxu0 0.0
        %656 = vmatpush1.msra.mxu0 0.0
        %657 = vmatprep.subr.mxu0 0.0
        %658 = vmatpush1.msra.mxu0 0.0
        %659 = vmatprep.subr.mxu0 0.0
        %660 = vmatpush1.msra.mxu0 0.0
        %661 = vmatprep.subr.mxu0 0.0
        %662 = vmatpush1.msra.mxu0 0.0
        %663 = vmatprep.subr.mxu0 0.0
        %664 = vmatpush1.msra.mxu0 0.0
        %665 = vmatprep.subr.mxu0 0.0
        %666 = vmatpush1.msra.mxu0 0.0
        %667 = vmatprep.subr.mxu0 0.0
        %668 = vmatpush1.msra.mxu0 0.0
        %669 = vmatprep.subr.mxu0 0.0
        %670 = vmatpush1.msra.mxu0 %v631
        %671 = vmatprep.subr.mxu0 0.0
        %672 = vmatpush1.msra.mxu0 %v630
        %673 = vmatprep.subr.mxu0 0.0
        %674 = vmatpush1.msra.mxu0 %v629
        %675 = vmatprep.subr.mxu0 0.0
        %676 = vmatpush1.msra.mxu0 %v628
        %677 = vmatprep.subr.mxu0 0.0
        %678 = vmatpush2.msra.mxu0 0.0
        %679 = vmatprep.subr.mxu0 0.0
        %680 = vmatpush2.msra.mxu0 0.0
        %681 = vmatprep.subr.mxu0 0.0
        %682 = vmatpush2.msra.mxu0 0.0
        %683 = vmatprep.subr.mxu0 0.0
        %684 = vmatpush2.msra.mxu0 0.0
        %685 = vmatprep.subr.mxu0 0.0
        %686 = vmatpush2.msra.mxu0 0.0
        %687 = vmatprep.subr.mxu0 0.0
        %688 = vmatpush2.msra.mxu0 0.0
        %689 = vmatprep.subr.mxu0 0.0
        %690 = vmatpush2.msra.mxu0 0.0
        %691 = vmatprep.subr.mxu0 0.0
        %692 = vmatpush2.msra.mxu0 0.0
        %693 = vmatprep.subr.mxu0 0.0
        %694 = vmatpush2.msra.mxu0 0.0
        %695 = vmatprep.subr.mxu0 0.0
        %696 = vmatpush2.msra.mxu0 0.0
        %697 = vmatprep.subr.mxu0 0.0
        %698 = vmatpush2.msra.mxu0 0.0
        %699 = vmatprep.subr.mxu0 0.0
        %700 = vmatpush2.msra.mxu0 0.0
        %701 = vmatprep.subr.mxu0 0.0
        %702 = vmatpush2.msra.mxu0 0.0
        %703 = vmatprep.subr.mxu0 0.0
        %704 = vmatpush2.msra.mxu0 0.0
        %705 = vmatprep.subr.mxu0 0.0
        %706 = vmatpush2.msra.mxu0 0.0
        %707 = vmatprep.subr.mxu0 0.0
        %708 = vmatpush2.msra.mxu0 0.0
        %709 = vmatprep.mubr.f32.mxu0 0.0
        %710 = vmatmul.mubr.f32.gmra.mxu0 %v634
        %v711 = vpop.f32.mrf.mxu0
        %v712 = vadd.f32 0.0, %v711
        %v713 = vpop.f32.mrf.mxu0
        %714 = vmatprep.mubr.f32.mxu0 0.0
        %715 = vmatmul.mubr.f32.gmra.mxu0 %v637
        %v716 = vpop.f32.mrf.mxu0
        %v717 = vadd.f32 0.0, %v716
        %v718 = vpop.f32.mrf.mxu0
        %719 = vmatprep.mubr.f32.mxu0 0.0
        %720 = vmatmul.mubr.f32.gmra.mxu0 %v640
        %v721 = vpop.f32.mrf.mxu0
        %v722 = vadd.f32 0.0, %v721
        %v723 = vpop.f32.mrf.mxu0
        %724 = vmatprep.mubr.f32.mxu0 0.0
        %725 = vmatmul.mubr.f32.gmra.mxu0 %v643
        %v726 = vpop.f32.mrf.mxu0
        %v727 = vadd.f32 0.0, %v726
        %v728 = vpop.f32.mrf.mxu0
        %729 = vdwg.mxu0
        %v730 = vmul.f32 %v712, %v712
        %v731 = vmul.f32 %v717, %v717
        %v732 = vmul.f32 %v722, %v722
        %v733 = vmul.f32 %v727, %v727
        %734 = vrot.lane.b32.xlu0 %v624, 96
        %v735 = vpop.permute.xlu0 %734
        %736 = vrot.lane.b32.xlu0 %v625, 96
        %v737 = vpop.permute.xlu0 %736
        %738 = vrot.lane.b32.xlu0 %v626, 96
        %v739 = vpop.permute.xlu0 %738
        %740 = vrot.lane.b32.xlu0 %v627, 96
        %v741 = vpop.permute.xlu0 %740
        %v742 = vsel %vm632, %v735, 0
        %v744 = vsel %vm632, %v737, 0
        %v746 = vsel %vm632, %v739, 0
        %v748 = vsel %vm632, %v741, 0
        %750 = vmatprep.subr.mxu0 0.0
        %751 = vmatpush1.msra.mxu0 0.0
        %752 = vmatprep.subr.mxu0 0.0
        %753 = vmatpush1.msra.mxu0 0.0
        %754 = vmatprep.subr.mxu0 0.0
        %755 = vmatpush1.msra.mxu0 0.0
        %756 = vmatprep.subr.mxu0 0.0
        %757 = vmatpush1.msra.mxu0 0.0
        %758 = vmatprep.subr.mxu0 0.0
        %759 = vmatpush1.msra.mxu0 0.0
        %760 = vmatprep.subr.mxu0 0.0
        %761 = vmatpush1.msra.mxu0 0.0
        %762 = vmatprep.subr.mxu0 0.0
        %763 = vmatpush1.msra.mxu0 0.0
        %764 = vmatprep.subr.mxu0 0.0
        %765 = vmatpush1.msra.mxu0 0.0
        %766 = vmatprep.subr.mxu0 0.0
        %767 = vmatpush1.msra.mxu0 0.0
        %768 = vmatprep.subr.mxu0 0.0
        %769 = vmatpush1.msra.mxu0 0.0
        %770 = vmatprep.subr.mxu0 0.0
        %771 = vmatpush1.msra.mxu0 0.0
        %772 = vmatprep.subr.mxu0 0.0
        %773 = vmatpush1.msra.mxu0 0.0
        %774 = vmatprep.subr.mxu0 0.0
        %775 = vmatpush1.msra.mxu0 %v631
        %776 = vmatprep.subr.mxu0 0.0
        %777 = vmatpush1.msra.mxu0 %v630
        %778 = vmatprep.subr.mxu0 0.0
        %779 = vmatpush1.msra.mxu0 %v629
        %780 = vmatprep.subr.mxu0 0.0
        %781 = vmatpush1.msra.mxu0 %v628
        %782 = vmatprep.subr.mxu0 0.0
        %783 = vmatpush2.msra.mxu0 0.0
        %784 = vmatprep.subr.mxu0 0.0
        %785 = vmatpush2.msra.mxu0 0.0
        %786 = vmatprep.subr.mxu0 0.0
        %787 = vmatpush2.msra.mxu0 0.0
        %788 = vmatprep.subr.mxu0 0.0
        %789 = vmatpush2.msra.mxu0 0.0
        %790 = vmatprep.subr.mxu0 0.0
        %791 = vmatpush2.msra.mxu0 0.0
        %792 = vmatprep.subr.mxu0 0.0
        %793 = vmatpush2.msra.mxu0 0.0
        %794 = vmatprep.subr.mxu0 0.0
        %795 = vmatpush2.msra.mxu0 0.0
        %796 = vmatprep.subr.mxu0 0.0
        %797 = vmatpush2.msra.mxu0 0.0
        %798 = vmatprep.subr.mxu0 0.0
        %799 = vmatpush2.msra.mxu0 0.0
        %800 = vmatprep.subr.mxu0 0.0
        %801 = vmatpush2.msra.mxu0 0.0
        %802 = vmatprep.subr.mxu0 0.0
        %803 = vmatpush2.msra.mxu0 0.0
        %804 = vmatprep.subr.mxu0 0.0
        %805 = vmatpush2.msra.mxu0 0.0
        %806 = vmatprep.subr.mxu0 0.0
        %807 = vmatpush2.msra.mxu0 0.0
        %808 = vmatprep.subr.mxu0 0.0
        %809 = vmatpush2.msra.mxu0 0.0
        %810 = vmatprep.subr.mxu0 0.0
        %811 = vmatpush2.msra.mxu0 0.0
        %812 = vmatprep.subr.mxu0 0.0
        %813 = vmatpush2.msra.mxu0 0.0
        %814 = vmatprep.mubr.f32.mxu0 0.0
        %815 = vmatmul.mubr.f32.gmra.mxu0 %v742
        %v816 = vpop.f32.mrf.mxu0
        %v817 = vadd.f32 0.0, %v816
        %v818 = vpop.f32.mrf.mxu0
        %819 = vmatprep.mubr.f32.mxu0 0.0
        %820 = vmatmul.mubr.f32.gmra.mxu0 %v744
        %v821 = vpop.f32.mrf.mxu0
        %v822 = vadd.f32 0.0, %v821
        %v823 = vpop.f32.mrf.mxu0
        %824 = vmatprep.mubr.f32.mxu0 0.0
        %825 = vmatmul.mubr.f32.gmra.mxu0 %v746
        %v826 = vpop.f32.mrf.mxu0
        %v827 = vadd.f32 0.0, %v826
        %v828 = vpop.f32.mrf.mxu0
        %829 = vmatprep.mubr.f32.mxu0 0.0
        %830 = vmatmul.mubr.f32.gmra.mxu0 %v748
        %v831 = vpop.f32.mrf.mxu0
        %v832 = vadd.f32 0.0, %v831
        %v833 = vpop.f32.mrf.mxu0
        %834 = vdwg.mxu0
        %v835 = vmul.f32 %v817, %v817
        %v836 = vmul.f32 %v822, %v822
        %v837 = vmul.f32 %v827, %v827
        %v838 = vmul.f32 %v832, %v832
        %v839 = vadd.f32 %v730, %v835
        %v840 = vadd.f32 %v731, %v836
        %v841 = vadd.f32 %v732, %v837
        %v842 = vadd.f32 %v733, %v838
        %843 = vrot.lane.b32.xlu0 %v624, 64
        %v844 = vpop.permute.xlu0 %843
        %845 = vrot.lane.b32.xlu0 %v625, 64
        %v846 = vpop.permute.xlu0 %845
        %847 = vrot.lane.b32.xlu0 %v626, 64
        %v848 = vpop.permute.xlu0 %847
        %849 = vrot.lane.b32.xlu0 %v627, 64
        %v850 = vpop.permute.xlu0 %849
        %v851 = vsel %vm632, %v844, 0
        %v853 = vsel %vm632, %v846, 0
        %v855 = vsel %vm632, %v848, 0
        %v857 = vsel %vm632, %v850, 0
        %859 = vmatprep.subr.mxu0 0.0
        %860 = vmatpush1.msra.mxu0 0.0
        %861 = vmatprep.subr.mxu0 0.0
        %862 = vmatpush1.msra.mxu0 0.0
        %863 = vmatprep.subr.mxu0 0.0
        %864 = vmatpush1.msra.mxu0 0.0
        %865 = vmatprep.subr.mxu0 0.0
        %866 = vmatpush1.msra.mxu0 0.0
        %867 = vmatprep.subr.mxu0 0.0
        %868 = vmatpush1.msra.mxu0 0.0
        %869 = vmatprep.subr.mxu0 0.0
        %870 = vmatpush1.msra.mxu0 0.0
        %871 = vmatprep.subr.mxu0 0.0
        %872 = vmatpush1.msra.mxu0 0.0
        %873 = vmatprep.subr.mxu0 0.0
        %874 = vmatpush1.msra.mxu0 0.0
        %875 = vmatprep.subr.mxu0 0.0
        %876 = vmatpush1.msra.mxu0 0.0
        %877 = vmatprep.subr.mxu0 0.0
        %878 = vmatpush1.msra.mxu0 0.0
        %879 = vmatprep.subr.mxu0 0.0
        %880 = vmatpush1.msra.mxu0 0.0
        %881 = vmatprep.subr.mxu0 0.0
        %882 = vmatpush1.msra.mxu0 0.0
        %883 = vmatprep.subr.mxu0 0.0
        %884 = vmatpush1.msra.mxu0 %v631
        %885 = vmatprep.subr.mxu0 0.0
        %886 = vmatpush1.msra.mxu0 %v630
        %887 = vmatprep.subr.mxu0 0.0
        %888 = vmatpush1.msra.mxu0 %v629
        %889 = vmatprep.subr.mxu0 0.0
        %890 = vmatpush1.msra.mxu0 %v628
        %891 = vmatprep.subr.mxu0 0.0
        %892 = vmatpush2.msra.mxu0 0.0
        %893 = vmatprep.subr.mxu0 0.0
        %894 = vmatpush2.msra.mxu0 0.0
        %895 = vmatprep.subr.mxu0 0.0
        %896 = vmatpush2.msra.mxu0 0.0
        %897 = vmatprep.subr.mxu0 0.0
        %898 = vmatpush2.msra.mxu0 0.0
        %899 = vmatprep.subr.mxu0 0.0
        %900 = vmatpush2.msra.mxu0 0.0
        %901 = vmatprep.subr.mxu0 0.0
        %902 = vmatpush2.msra.mxu0 0.0
        %903 = vmatprep.subr.mxu0 0.0
        %904 = vmatpush2.msra.mxu0 0.0
        %905 = vmatprep.subr.mxu0 0.0
        %906 = vmatpush2.msra.mxu0 0.0
        %907 = vmatprep.subr.mxu0 0.0
        %908 = vmatpush2.msra.mxu0 0.0
        %909 = vmatprep.subr.mxu0 0.0
        %910 = vmatpush2.msra.mxu0 0.0
        %911 = vmatprep.subr.mxu0 0.0
        %912 = vmatpush2.msra.mxu0 0.0
        %913 = vmatprep.subr.mxu0 0.0
        %914 = vmatpush2.msra.mxu0 0.0
        %915 = vmatprep.subr.mxu0 0.0
        %916 = vmatpush2.msra.mxu0 0.0
        %917 = vmatprep.subr.mxu0 0.0
        %918 = vmatpush2.msra.mxu0 0.0
        %919 = vmatprep.subr.mxu0 0.0
        %920 = vmatpush2.msra.mxu0 0.0
        %921 = vmatprep.subr.mxu0 0.0
        %922 = vmatpush2.msra.mxu0 0.0
        %923 = vmatprep.mubr.f32.mxu0 0.0
        %924 = vmatmul.mubr.f32.gmra.mxu0 %v851
        %v925 = vpop.f32.mrf.mxu0
        %v926 = vadd.f32 0.0, %v925
        %v927 = vpop.f32.mrf.mxu0
        %928 = vmatprep.mubr.f32.mxu0 0.0
        %929 = vmatmul.mubr.f32.gmra.mxu0 %v853
        %v930 = vpop.f32.mrf.mxu0
        %v931 = vadd.f32 0.0, %v930
        %v932 = vpop.f32.mrf.mxu0
        %933 = vmatprep.mubr.f32.mxu0 0.0
        %934 = vmatmul.mubr.f32.gmra.mxu0 %v855
        %v935 = vpop.f32.mrf.mxu0
        %v936 = vadd.f32 0.0, %v935
        %v937 = vpop.f32.mrf.mxu0
        %938 = vmatprep.mubr.f32.mxu0 0.0
        %939 = vmatmul.mubr.f32.gmra.mxu0 %v857
        %v940 = vpop.f32.mrf.mxu0
        %v941 = vadd.f32 0.0, %v940
        %v942 = vpop.f32.mrf.mxu0
        %943 = vdwg.mxu0
        %v944 = vmul.f32 %v926, %v926
        %v945 = vmul.f32 %v931, %v931
        %v946 = vmul.f32 %v936, %v936
        %v947 = vmul.f32 %v941, %v941
        %v948 = vadd.f32 %v839, %v944
        %v949 = vadd.f32 %v840, %v945
        %v950 = vadd.f32 %v841, %v946
        %v951 = vadd.f32 %v842, %v947
        %v952 = vrsqrt.pop %v948
        %v953 = vmul.f32 %v948, %v952
        %vm954 = vcmp.eq.f32.partialorder %v948, inf
        %v955 = vsel %vm954, %v948, %v953
        %vm956 = vcmp.eq.f32.partialorder %v948, 0.0
        %v957 = vand.u32 %v948, 2147483648
        %v958 = vsel %vm956, %v957, %v955
        %v959 = vrsqrt.pop %v949
        %v960 = vmul.f32 %v949, %v959
        %vm961 = vcmp.eq.f32.partialorder %v949, inf
        %v962 = vsel %vm961, %v949, %v960
        %vm963 = vcmp.eq.f32.partialorder %v949, 0.0
        %v964 = vand.u32 %v949, 2147483648
        %v965 = vsel %vm963, %v964, %v962
        %v966 = vrsqrt.pop %v950
        %v967 = vmul.f32 %v950, %v966
        %vm968 = vcmp.eq.f32.partialorder %v950, inf
        %v969 = vsel %vm968, %v950, %v967
        %vm970 = vcmp.eq.f32.partialorder %v950, 0.0
        %v971 = vand.u32 %v950, 2147483648
        %v972 = vsel %vm970, %v971, %v969
        %v973 = vrsqrt.pop %v951
        %v974 = vmul.f32 %v951, %v973
        %vm975 = vcmp.eq.f32.partialorder %v951, inf
        %v976 = vsel %vm975, %v951, %v974
        %vm977 = vcmp.eq.f32.partialorder %v951, 0.0
        %v978 = vand.u32 %v951, 2147483648
        %v979 = vsel %vm977, %v978, %v976
        %v980 = vld [vmem:[#allocation3] sm:$0xff]
        %v981 = vld [vmem:[#allocation3 + $0x8] sm:$0xff]
        %v982 = vld [vmem:[#allocation3 + $0x10] sm:$0xff]
        %v983 = vld [vmem:[#allocation3 + $0x18] sm:$0xff]
        %v984 = vld [vmem:[#allocation5] sm:$0xff]
        %v985 = vld [vmem:[#allocation5 + $0x8] sm:$0xff]
        %v986 = vld [vmem:[#allocation5 + $0x10] sm:$0xff]
        %v987 = vld [vmem:[#allocation5 + $0x18] sm:$0xff]
        %v989 = vsel %vm632, %v958, 0
        %v992 = vsel %vm632, %v965, 0
        %v995 = vsel %vm632, %v972, 0
        %v998 = vsel %vm632, %v979, 0
        %1000 = vmatprep.subr.mxu0 0.0
        %1001 = vmatpush1.msra.mxu0 0.0
        %1002 = vmatprep.subr.mxu0 0.0
        %1003 = vmatpush1.msra.mxu0 0.0
        %1004 = vmatprep.subr.mxu0 0.0
        %1005 = vmatpush1.msra.mxu0 0.0
        %1006 = vmatprep.subr.mxu0 0.0
        %1007 = vmatpush1.msra.mxu0 0.0
        %1008 = vmatprep.subr.mxu0 0.0
        %1009 = vmatpush1.msra.mxu0 0.0
        %1010 = vmatprep.subr.mxu0 0.0
        %1011 = vmatpush1.msra.mxu0 0.0
        %1012 = vmatprep.subr.mxu0 0.0
        %1013 = vmatpush1.msra.mxu0 0.0
        %1014 = vmatprep.subr.mxu0 0.0
        %1015 = vmatpush1.msra.mxu0 0.0
        %1016 = vmatprep.subr.mxu0 0.0
        %1017 = vmatpush1.msra.mxu0 0.0
        %1018 = vmatprep.subr.mxu0 0.0
        %1019 = vmatpush1.msra.mxu0 0.0
        %1020 = vmatprep.subr.mxu0 0.0
        %1021 = vmatpush1.msra.mxu0 0.0
        %1022 = vmatprep.subr.mxu0 0.0
        %1023 = vmatpush1.msra.mxu0 0.0
        %1024 = vmatprep.subr.mxu0 0.0
        %1025 = vmatpush1.msra.mxu0 %v987
        %1026 = vmatprep.subr.mxu0 0.0
        %1027 = vmatpush1.msra.mxu0 %v986
        %1028 = vmatprep.subr.mxu0 0.0
        %1029 = vmatpush1.msra.mxu0 %v985
        %1030 = vmatprep.subr.mxu0 0.0
        %1031 = vmatpush1.msra.mxu0 %v984
        %1032 = vmatprep.subr.mxu0 0.0
        %1033 = vmatpush2.msra.mxu0 0.0
        %1034 = vmatprep.subr.mxu0 0.0
        %1035 = vmatpush2.msra.mxu0 0.0
        %1036 = vmatprep.subr.mxu0 0.0
        %1037 = vmatpush2.msra.mxu0 0.0
        %1038 = vmatprep.subr.mxu0 0.0
        %1039 = vmatpush2.msra.mxu0 0.0
        %1040 = vmatprep.subr.mxu0 0.0
        %1041 = vmatpush2.msra.mxu0 0.0
        %1042 = vmatprep.subr.mxu0 0.0
        %1043 = vmatpush2.msra.mxu0 0.0
        %1044 = vmatprep.subr.mxu0 0.0
        %1045 = vmatpush2.msra.mxu0 0.0
        %1046 = vmatprep.subr.mxu0 0.0
        %1047 = vmatpush2.msra.mxu0 0.0
        %1048 = vmatprep.subr.mxu0 0.0
        %1049 = vmatpush2.msra.mxu0 0.0
        %1050 = vmatprep.subr.mxu0 0.0
        %1051 = vmatpush2.msra.mxu0 0.0
        %1052 = vmatprep.subr.mxu0 0.0
        %1053 = vmatpush2.msra.mxu0 0.0
        %1054 = vmatprep.subr.mxu0 0.0
        %1055 = vmatpush2.msra.mxu0 0.0
        %1056 = vmatprep.subr.mxu0 0.0
        %1057 = vmatpush2.msra.mxu0 0.0
        %1058 = vmatprep.subr.mxu0 0.0
        %1059 = vmatpush2.msra.mxu0 0.0
        %1060 = vmatprep.subr.mxu0 0.0
        %1061 = vmatpush2.msra.mxu0 0.0
        %1062 = vmatprep.subr.mxu0 0.0
        %1063 = vmatpush2.msra.mxu0 0.0
        %1064 = vmatprep.mubr.f32.mxu0 0.0
        %1065 = vmatmul.mubr.f32.gmra.mxu0 %v989
        %v1066 = vpop.f32.mrf.mxu0
        %v1067 = vadd.f32 0.0, %v1066
        %v1068 = vpop.f32.mrf.mxu0
        %1069 = vmatprep.mubr.f32.mxu0 0.0
        %1070 = vmatmul.mubr.f32.gmra.mxu0 %v992
        %v1071 = vpop.f32.mrf.mxu0
        %v1072 = vadd.f32 0.0, %v1071
        %v1073 = vpop.f32.mrf.mxu0
        %1074 = vmatprep.mubr.f32.mxu0 0.0
        %1075 = vmatmul.mubr.f32.gmra.mxu0 %v995
        %v1076 = vpop.f32.mrf.mxu0
        %v1077 = vadd.f32 0.0, %v1076
        %v1078 = vpop.f32.mrf.mxu0
        %1079 = vmatprep.mubr.f32.mxu0 0.0
        %1080 = vmatmul.mubr.f32.gmra.mxu0 %v998
        %v1081 = vpop.f32.mrf.mxu0
        %v1082 = vadd.f32 0.0, %v1081
        %v1083 = vpop.f32.mrf.mxu0
        %1084 = vdwg.mxu0
        %v1086 = vsel %vm632, %v620, 0
        %v1089 = vsel %vm632, %v621, 0
        %v1092 = vsel %vm632, %v622, 0
        %v1095 = vsel %vm632, %v623, 0
        %1097 = vmatprep.subr.mxu0 0.0
        %1098 = vmatpush1.msra.mxu0 0.0
        %1099 = vmatprep.subr.mxu0 0.0
        %1100 = vmatpush1.msra.mxu0 0.0
        %1101 = vmatprep.subr.mxu0 0.0
        %1102 = vmatpush1.msra.mxu0 0.0
        %1103 = vmatprep.subr.mxu0 0.0
        %1104 = vmatpush1.msra.mxu0 0.0
        %1105 = vmatprep.subr.mxu0 0.0
        %1106 = vmatpush1.msra.mxu0 0.0
        %1107 = vmatprep.subr.mxu0 0.0
        %1108 = vmatpush1.msra.mxu0 0.0
        %1109 = vmatprep.subr.mxu0 0.0
        %1110 = vmatpush1.msra.mxu0 0.0
        %1111 = vmatprep.subr.mxu0 0.0
        %1112 = vmatpush1.msra.mxu0 0.0
        %1113 = vmatprep.subr.mxu0 0.0
        %1114 = vmatpush1.msra.mxu0 0.0
        %1115 = vmatprep.subr.mxu0 0.0
        %1116 = vmatpush1.msra.mxu0 0.0
        %1117 = vmatprep.subr.mxu0 0.0
        %1118 = vmatpush1.msra.mxu0 0.0
        %1119 = vmatprep.subr.mxu0 0.0
        %1120 = vmatpush1.msra.mxu0 0.0
        %1121 = vmatprep.subr.mxu0 0.0
        %1122 = vmatpush1.msra.mxu0 %v983
        %1123 = vmatprep.subr.mxu0 0.0
        %1124 = vmatpush1.msra.mxu0 %v982
        %1125 = vmatprep.subr.mxu0 0.0
        %1126 = vmatpush1.msra.mxu0 %v981
        %1127 = vmatprep.subr.mxu0 0.0
        %1128 = vmatpush1.msra.mxu0 %v980
        %1129 = vmatprep.subr.mxu0 0.0
        %1130 = vmatpush2.msra.mxu0 0.0
        %1131 = vmatprep.subr.mxu0 0.0
        %1132 = vmatpush2.msra.mxu0 0.0
        %1133 = vmatprep.subr.mxu0 0.0
        %1134 = vmatpush2.msra.mxu0 0.0
        %1135 = vmatprep.subr.mxu0 0.0
        %1136 = vmatpush2.msra.mxu0 0.0
        %1137 = vmatprep.subr.mxu0 0.0
        %1138 = vmatpush2.msra.mxu0 0.0
        %1139 = vmatprep.subr.mxu0 0.0
        %1140 = vmatpush2.msra.mxu0 0.0
        %1141 = vmatprep.subr.mxu0 0.0
        %1142 = vmatpush2.msra.mxu0 0.0
        %1143 = vmatprep.subr.mxu0 0.0
        %1144 = vmatpush2.msra.mxu0 0.0
        %1145 = vmatprep.subr.mxu0 0.0
        %1146 = vmatpush2.msra.mxu0 0.0
        %1147 = vmatprep.subr.mxu0 0.0
        %1148 = vmatpush2.msra.mxu0 0.0
        %1149 = vmatprep.subr.mxu0 0.0
        %1150 = vmatpush2.msra.mxu0 0.0
        %1151 = vmatprep.subr.mxu0 0.0
        %1152 = vmatpush2.msra.mxu0 0.0
        %1153 = vmatprep.subr.mxu0 0.0
        %1154 = vmatpush2.msra.mxu0 0.0
        %1155 = vmatprep.subr.mxu0 0.0
        %1156 = vmatpush2.msra.mxu0 0.0
        %1157 = vmatprep.subr.mxu0 0.0
        %1158 = vmatpush2.msra.mxu0 0.0
        %1159 = vmatprep.subr.mxu0 0.0
        %1160 = vmatpush2.msra.mxu0 0.0
        %1161 = vmatprep.mubr.f32.mxu0 0.0
        %1162 = vmatmul.mubr.f32.gmra.mxu0 %v1086
        %v1163 = vpop.f32.mrf.mxu0
        %v1164 = vadd.f32 %v1067, %v1163
        %v1165 = vpop.f32.mrf.mxu0
        %1166 = vmatprep.mubr.f32.mxu0 0.0
        %1167 = vmatmul.mubr.f32.gmra.mxu0 %v1089
        %v1168 = vpop.f32.mrf.mxu0
        %v1169 = vadd.f32 %v1072, %v1168
        %v1170 = vpop.f32.mrf.mxu0
        %1171 = vmatprep.mubr.f32.mxu0 0.0
        %1172 = vmatmul.mubr.f32.gmra.mxu0 %v1092
        %v1173 = vpop.f32.mrf.mxu0
        %v1174 = vadd.f32 %v1077, %v1173
        %v1175 = vpop.f32.mrf.mxu0
        %1176 = vmatprep.mubr.f32.mxu0 0.0
        %1177 = vmatmul.mubr.f32.gmra.mxu0 %v1095
        %v1178 = vpop.f32.mrf.mxu0
        %v1179 = vadd.f32 %v1082, %v1178
        %v1180 = vpop.f32.mrf.mxu0
        %1181 = vdwg.mxu0
        %v1182 = vld [vmem:[#allocation7] sm:$0x1]
        %v1184 = vlaneseq
        %v1185 = vshrl.u32 %v1184, 7
        %v1186 = vsub.s32 0, %v1185
        %v1187 = vrot.slane %v1182, %v1186
        %v1189 = vadd.f32 %v1164, %v1187
        %v1190 = vadd.f32 %v1169, %v1187
        %v1191 = vadd.f32 %v1174, %v1187
        %v1192 = vadd.f32 %v1179, %v1187
        %v1193 = vxor.u32 %v1189, 2147483648
        %v1194 = vxor.u32 %v1190, 2147483648
        %v1195 = vxor.u32 %v1191, 2147483648
        %v1196 = vxor.u32 %v1192, 2147483648
        %v1197 = vmul.f32 %v1193, 1.442695
        %v1198 = vpow.pop %v1197
        %v1199 = vmul.f32 %v1194, 1.442695
        %v1200 = vpow.pop %v1199
        %v1201 = vmul.f32 %v1195, 1.442695
        %v1202 = vpow.pop %v1201
        %v1203 = vmul.f32 %v1196, 1.442695
        %v1204 = vpow.pop %v1203
        %v1205 = vadd.f32 %v1198, 1.0
        %v1206 = vadd.f32 %v1200, 1.0
        %v1207 = vadd.f32 %v1202, 1.0
        %v1208 = vadd.f32 %v1204, 1.0
        %v1209 = vrcp.pop %v1205
        %v1210 = vmul.f32 1.0, %v1209
        %v1211 = vrcp.pop %v1206
        %v1212 = vmul.f32 1.0, %v1211
        %v1213 = vrcp.pop %v1207
        %v1214 = vmul.f32 1.0, %v1213
        %v1215 = vrcp.pop %v1208
        %v1216 = vmul.f32 1.0, %v1215
        %v1217 = vmul.f32 %v1189, %v1210
        %v1218 = vmul.f32 %v1190, %v1212
        %v1219 = vmul.f32 %v1191, %v1214
        %v1220 = vmul.f32 %v1192, %v1216
        %v1221 = vld [vmem:[#allocation8] sm:$0xff]
        %v1222 = vld [vmem:[#allocation8 + $0x8] sm:$0xff]
        %v1223 = vld [vmem:[#allocation8 + $0x10] sm:$0xff]
        %v1224 = vld [vmem:[#allocation8 + $0x18] sm:$0xff]
        %v1225 = vld [vmem:[#allocation10] sm:$0x1]
        %v1227 = vlaneseq
        %v1228 = vshrl.u32 %v1227, 7
        %v1229 = vsub.s32 0, %v1228
        %v1230 = vrot.slane %v1225, %v1229
        %v1233 = vsel %vm632, %v1217, 0
        %v1236 = vsel %vm632, %v1218, 0
        %v1239 = vsel %vm632, %v1219, 0
        %v1242 = vsel %vm632, %v1220, 0
        %1244 = vmatprep.subr.mxu0 0.0
        %1245 = vmatpush1.msra.mxu0 0.0
        %1246 = vmatprep.subr.mxu0 0.0
        %1247 = vmatpush1.msra.mxu0 0.0
        %1248 = vmatprep.subr.mxu0 0.0
        %1249 = vmatpush1.msra.mxu0 0.0
        %1250 = vmatprep.subr.mxu0 0.0
        %1251 = vmatpush1.msra.mxu0 0.0
        %1252 = vmatprep.subr.mxu0 0.0
        %1253 = vmatpush1.msra.mxu0 0.0
        %1254 = vmatprep.subr.mxu0 0.0
        %1255 = vmatpush1.msra.mxu0 0.0
        %1256 = vmatprep.subr.mxu0 0.0
        %1257 = vmatpush1.msra.mxu0 0.0
        %1258 = vmatprep.subr.mxu0 0.0
        %1259 = vmatpush1.msra.mxu0 0.0
        %1260 = vmatprep.subr.mxu0 0.0
        %1261 = vmatpush1.msra.mxu0 0.0
        %1262 = vmatprep.subr.mxu0 0.0
        %1263 = vmatpush1.msra.mxu0 0.0
        %1264 = vmatprep.subr.mxu0 0.0
        %1265 = vmatpush1.msra.mxu0 0.0
        %1266 = vmatprep.subr.mxu0 0.0
        %1267 = vmatpush1.msra.mxu0 0.0
        %1268 = vmatprep.subr.mxu0 0.0
        %1269 = vmatpush1.msra.mxu0 %v1224
        %1270 = vmatprep.subr.mxu0 0.0
        %1271 = vmatpush1.msra.mxu0 %v1223
        %1272 = vmatprep.subr.mxu0 0.0
        %1273 = vmatpush1.msra.mxu0 %v1222
        %1274 = vmatprep.subr.mxu0 0.0
        %1275 = vmatpush1.msra.mxu0 %v1221
        %1276 = vmatprep.subr.mxu0 0.0
        %1277 = vmatpush2.msra.mxu0 0.0
        %1278 = vmatprep.subr.mxu0 0.0
        %1279 = vmatpush2.msra.mxu0 0.0
        %1280 = vmatprep.subr.mxu0 0.0
        %1281 = vmatpush2.msra.mxu0 0.0
        %1282 = vmatprep.subr.mxu0 0.0
        %1283 = vmatpush2.msra.mxu0 0.0
        %1284 = vmatprep.subr.mxu0 0.0
        %1285 = vmatpush2.msra.mxu0 0.0
        %1286 = vmatprep.subr.mxu0 0.0
        %1287 = vmatpush2.msra.mxu0 0.0
        %1288 = vmatprep.subr.mxu0 0.0
        %1289 = vmatpush2.msra.mxu0 0.0
        %1290 = vmatprep.subr.mxu0 0.0
        %1291 = vmatpush2.msra.mxu0 0.0
        %1292 = vmatprep.subr.mxu0 0.0
        %1293 = vmatpush2.msra.mxu0 0.0
        %1294 = vmatprep.subr.mxu0 0.0
        %1295 = vmatpush2.msra.mxu0 0.0
        %1296 = vmatprep.subr.mxu0 0.0
        %1297 = vmatpush2.msra.mxu0 0.0
        %1298 = vmatprep.subr.mxu0 0.0
        %1299 = vmatpush2.msra.mxu0 0.0
        %1300 = vmatprep.subr.mxu0 0.0
        %1301 = vmatpush2.msra.mxu0 0.0
        %1302 = vmatprep.subr.mxu0 0.0
        %1303 = vmatpush2.msra.mxu0 0.0
        %1304 = vmatprep.subr.mxu0 0.0
        %1305 = vmatpush2.msra.mxu0 0.0
        %1306 = vmatprep.subr.mxu0 0.0
        %1307 = vmatpush2.msra.mxu0 0.0
        %1308 = vmatprep.mubr.f32.mxu0 0.0
        %1309 = vmatmul.mubr.f32.gmra.mxu0 %v1233
        %v1310 = vpop.f32.mrf.mxu0
        %v1311 = vadd.f32 %v1230, %v1310
        %v1312 = vpop.f32.mrf.mxu0
        %1313 = vmatprep.mubr.f32.mxu0 0.0
        %1314 = vmatmul.mubr.f32.gmra.mxu0 %v1236
        %v1315 = vpop.f32.mrf.mxu0
        %v1316 = vadd.f32 %v1230, %v1315
        %v1317 = vpop.f32.mrf.mxu0
        %1318 = vmatprep.mubr.f32.mxu0 0.0
        %1319 = vmatmul.mubr.f32.gmra.mxu0 %v1239
        %v1320 = vpop.f32.mrf.mxu0
        %v1321 = vadd.f32 %v1230, %v1320
        %v1322 = vpop.f32.mrf.mxu0
        %1323 = vmatprep.mubr.f32.mxu0 0.0
        %1324 = vmatmul.mubr.f32.gmra.mxu0 %v1242
        %v1325 = vpop.f32.mrf.mxu0
        %v1326 = vadd.f32 %v1230, %v1325
        %v1327 = vpop.f32.mrf.mxu0
        %1328 = vdwg.mxu0
        %v1329 = vxor.u32 %v1311, 2147483648
        %v1330 = vxor.u32 %v1316, 2147483648
        %v1331 = vxor.u32 %v1321, 2147483648
        %v1332 = vxor.u32 %v1326, 2147483648
        %v1333 = vmul.f32 %v1329, 1.442695
        %v1334 = vpow.pop %v1333
        %v1335 = vmul.f32 %v1330, 1.442695
        %v1336 = vpow.pop %v1335
        %v1337 = vmul.f32 %v1331, 1.442695
        %v1338 = vpow.pop %v1337
        %v1339 = vmul.f32 %v1332, 1.442695
        %v1340 = vpow.pop %v1339
        %v1341 = vadd.f32 %v1334, 1.0
        %v1342 = vadd.f32 %v1336, 1.0
        %v1343 = vadd.f32 %v1338, 1.0
        %v1344 = vadd.f32 %v1340, 1.0
        %v1345 = vrcp.pop %v1341
        %v1346 = vmul.f32 1.0, %v1345
        %v1347 = vrcp.pop %v1342
        %v1348 = vmul.f32 1.0, %v1347
        %v1349 = vrcp.pop %v1343
        %v1350 = vmul.f32 1.0, %v1349
        %v1351 = vrcp.pop %v1344
        %v1352 = vmul.f32 1.0, %v1351
        %v1353 = vmul.f32 %v1311, %v1346
        %v1354 = vmul.f32 %v1316, %v1348
        %v1355 = vmul.f32 %v1321, %v1350
        %v1356 = vmul.f32 %v1326, %v1352
        %1361 = vrot.lane.b32.xlu0 %v712, 112
        %v1362 = vpop.permute.xlu0 %1361
        %1363 = vrot.lane.b32.xlu0 %v717, 112
        %v1364 = vpop.permute.xlu0 %1363
        %1365 = vrot.lane.b32.xlu0 %v722, 112
        %v1366 = vpop.permute.xlu0 %1365
        %1367 = vrot.lane.b32.xlu0 %v727, 112
        %v1368 = vpop.permute.xlu0 %1367
        %v1373 = vmul.f32 %v1311, %v1362
        %v1374 = vmul.f32 %v1316, %v1364
        %v1375 = vmul.f32 %v1321, %v1366
        %v1376 = vmul.f32 %v1326, %v1368
        %v1377 = vld [vmem:[%s8] sm:$0xff]
        %v1378 = vld [vmem:[%s8 + $0x8] sm:$0xff]
        %1383 = vrot.lane.b32.xlu0 %v1373, 112
        %v1384 = vpop.permute.xlu0 %1383
        %1385 = vrot.lane.b32.xlu0 %v1374, 112
        %v1386 = vpop.permute.xlu0 %1385
        %1387 = vrot.lane.b32.xlu0 %v1375, 112
        %v1388 = vpop.permute.xlu0 %1387
        %1389 = vrot.lane.b32.xlu0 %v1376, 112
        %v1390 = vpop.permute.xlu0 %1389
        %vm1391 = vcmask 130048
        %v1392 = vsel %vm1391, %v1384, 0
        %v1394 = vsel %vm1391, %v1386, 0
        %v1396 = vsel %vm1391, %v1388, 0
        %v1398 = vsel %vm1391, %v1390, 0
        %1400 = vmatprep.subr.mxu0 0.0
        %1401 = vmatpush1.msra.mxu0 0.0
        %1402 = vmatprep.subr.mxu0 0.0
        %1403 = vmatpush1.msra.mxu0 0.0
        %1404 = vmatprep.subr.mxu0 0.0
        %1405 = vmatpush1.msra.mxu0 0.0
        %1406 = vmatprep.subr.mxu0 0.0
        %1407 = vmatpush1.msra.mxu0 0.0
        %1408 = vmatprep.subr.mxu0 0.0
        %1409 = vmatpush1.msra.mxu0 0.0
        %1410 = vmatprep.subr.mxu0 0.0
        %1411 = vmatpush1.msra.mxu0 0.0
        %1412 = vmatprep.subr.mxu0 0.0
        %1413 = vmatpush1.msra.mxu0 0.0
        %1414 = vmatprep.subr.mxu0 0.0
        %1415 = vmatpush1.msra.mxu0 0.0
        %1416 = vmatprep.subr.mxu0 0.0
        %1417 = vmatpush1.msra.mxu0 0.0
        %1418 = vmatprep.subr.mxu0 0.0
        %1419 = vmatpush1.msra.mxu0 0.0
        %1420 = vmatprep.subr.mxu0 0.0
        %1421 = vmatpush1.msra.mxu0 0.0
        %1422 = vmatprep.subr.mxu0 0.0
        %1423 = vmatpush1.msra.mxu0 0.0
        %1424 = vmatprep.subr.mxu0 0.0
        %1425 = vmatpush1.msra.mxu0 0.0
        %1426 = vmatprep.subr.mxu0 0.0
        %1427 = vmatpush1.msra.mxu0 0.0
        %1428 = vmatprep.subr.mxu0 0.0
        %1429 = vmatpush1.msra.mxu0 %v1378
        %1430 = vmatprep.subr.mxu0 0.0
        %1431 = vmatpush1.msra.mxu0 %v1377
        %1432 = vmatprep.subr.mxu0 0.0
        %1433 = vmatpush2.msra.mxu0 0.0
        %1434 = vmatprep.subr.mxu0 0.0
        %1435 = vmatpush2.msra.mxu0 0.0
        %1436 = vmatprep.subr.mxu0 0.0
        %1437 = vmatpush2.msra.mxu0 0.0
        %1438 = vmatprep.subr.mxu0 0.0
        %1439 = vmatpush2.msra.mxu0 0.0
        %1440 = vmatprep.subr.mxu0 0.0
        %1441 = vmatpush2.msra.mxu0 0.0
        %1442 = vmatprep.subr.mxu0 0.0
        %1443 = vmatpush2.msra.mxu0 0.0
        %1444 = vmatprep.subr.mxu0 0.0
        %1445 = vmatpush2.msra.mxu0 0.0
        %1446 = vmatprep.subr.mxu0 0.0
        %1447 = vmatpush2.msra.mxu0 0.0
        %1448 = vmatprep.subr.mxu0 0.0
        %1449 = vmatpush2.msra.mxu0 0.0
        %1450 = vmatprep.subr.mxu0 0.0
        %1451 = vmatpush2.msra.mxu0 0.0
        %1452 = vmatprep.subr.mxu0 0.0
        %1453 = vmatpush2.msra.mxu0 0.0
        %1454 = vmatprep.subr.mxu0 0.0
        %1455 = vmatpush2.msra.mxu0 0.0
        %1456 = vmatprep.subr.mxu0 0.0
        %1457 = vmatpush2.msra.mxu0 0.0
        %1458 = vmatprep.subr.mxu0 0.0
        %1459 = vmatpush2.msra.mxu0 0.0
        %1460 = vmatprep.subr.mxu0 0.0
        %1461 = vmatpush2.msra.mxu0 0.0
        %1462 = vmatprep.subr.mxu0 0.0
        %1463 = vmatpush2.msra.mxu0 0.0
        %1464 = vmatprep.mubr.f32.mxu0 0.0
        %1465 = vmatmul.mubr.f32.gmra.mxu0 %v1392
        %v1466 = vpop.f32.mrf.mxu0
        %v1467 = vadd.f32 0.0, %v1466
        %v1468 = vpop.f32.mrf.mxu0
        %1469 = vmatprep.mubr.f32.mxu0 0.0
        %1470 = vmatmul.mubr.f32.gmra.mxu0 %v1394
        %v1471 = vpop.f32.mrf.mxu0
        %v1472 = vadd.f32 0.0, %v1471
        %v1473 = vpop.f32.mrf.mxu0
        %1474 = vmatprep.mubr.f32.mxu0 0.0
        %1475 = vmatmul.mubr.f32.gmra.mxu0 %v1396
        %v1476 = vpop.f32.mrf.mxu0
        %v1477 = vadd.f32 0.0, %v1476
        %v1478 = vpop.f32.mrf.mxu0
        %1479 = vmatprep.mubr.f32.mxu0 0.0
        %1480 = vmatmul.mubr.f32.gmra.mxu0 %v1398
        %v1481 = vpop.f32.mrf.mxu0
        %v1482 = vadd.f32 0.0, %v1481
        %v1483 = vpop.f32.mrf.mxu0
        %1484 = vdwg.mxu0
        %v1485 = vmul.f32 %v1467, %v1467
        %v1486 = vmul.f32 %v1472, %v1472
        %v1487 = vmul.f32 %v1477, %v1477
        %v1488 = vmul.f32 %v1482, %v1482
        %v1489 = vld [vmem:[%s9] sm:$0x1]
        %v1491 = vlaneseq
        %v1492 = vshrl.u32 %v1491, 7
        %v1493 = vsub.s32 0, %v1492
        %v1494 = vrot.slane %v1489, %v1493
        %1495 = vrot.lane.b32.xlu0 %v1494, 16
        %v1496 = vpop.permute.xlu0 %1495
        %v1498 = vmul.f32 %v1373, %v1496
        %v1499 = vmul.f32 %v1374, %v1496
        %v1500 = vmul.f32 %v1375, %v1496
        %v1501 = vmul.f32 %v1376, %v1496
        %1506 = vrot.lane.b32.xlu0 %v1498, 112
        %v1507 = vpop.permute.xlu0 %1506
        %1508 = vrot.lane.b32.xlu0 %v1499, 112
        %v1509 = vpop.permute.xlu0 %1508
        %1510 = vrot.lane.b32.xlu0 %v1500, 112
        %v1511 = vpop.permute.xlu0 %1510
        %1512 = vrot.lane.b32.xlu0 %v1501, 112
        %v1513 = vpop.permute.xlu0 %1512
        %v1518 = vsel %vm1391, %v1507, 0.0
        %1519 = vadd.xlane.f32.xlu0 %v1518
        %v1520 = vpop.xlane.xlu0 %1519
        %v1521 = vsel %vm1391, %v1509, 0.0
        %1522 = vadd.xlane.f32.xlu0 %v1521
        %v1523 = vpop.xlane.xlu0 %1522
        %v1524 = vsel %vm1391, %v1511, 0.0
        %1525 = vadd.xlane.f32.xlu0 %v1524
        %v1526 = vpop.xlane.xlu0 %1525
        %v1527 = vsel %vm1391, %v1513, 0.0
        %1528 = vadd.xlane.f32.xlu0 %v1527
        %v1529 = vpop.xlane.xlu0 %1528
        %1534 = vrot.lane.b32.xlu0 %v817, 112
        %v1535 = vpop.permute.xlu0 %1534
        %1536 = vrot.lane.b32.xlu0 %v822, 112
        %v1537 = vpop.permute.xlu0 %1536
        %1538 = vrot.lane.b32.xlu0 %v827, 112
        %v1539 = vpop.permute.xlu0 %1538
        %1540 = vrot.lane.b32.xlu0 %v832, 112
        %v1541 = vpop.permute.xlu0 %1540
        %v1546 = vmul.f32 %v1311, %v1535
        %v1547 = vmul.f32 %v1316, %v1537
        %v1548 = vmul.f32 %v1321, %v1539
        %v1549 = vmul.f32 %v1326, %v1541
        %1554 = vrot.lane.b32.xlu0 %v1546, 112
        %v1555 = vpop.permute.xlu0 %1554
        %1556 = vrot.lane.b32.xlu0 %v1547, 112
        %v1557 = vpop.permute.xlu0 %1556
        %1558 = vrot.lane.b32.xlu0 %v1548, 112
        %v1559 = vpop.permute.xlu0 %1558
        %1560 = vrot.lane.b32.xlu0 %v1549, 112
        %v1561 = vpop.permute.xlu0 %1560
        %v1562 = vsel %vm1391, %v1555, 0
        %v1564 = vsel %vm1391, %v1557, 0
        %v1566 = vsel %vm1391, %v1559, 0
        %v1568 = vsel %vm1391, %v1561, 0
        %1570 = vmatprep.subr.mxu0 0.0
        %1571 = vmatpush1.msra.mxu0 0.0
        %1572 = vmatprep.subr.mxu0 0.0
        %1573 = vmatpush1.msra.mxu0 0.0
        %1574 = vmatprep.subr.mxu0 0.0
        %1575 = vmatpush1.msra.mxu0 0.0
        %1576 = vmatprep.subr.mxu0 0.0
        %1577 = vmatpush1.msra.mxu0 0.0
        %1578 = vmatprep.subr.mxu0 0.0
        %1579 = vmatpush1.msra.mxu0 0.0
        %1580 = vmatprep.subr.mxu0 0.0
        %1581 = vmatpush1.msra.mxu0 0.0
        %1582 = vmatprep.subr.mxu0 0.0
        %1583 = vmatpush1.msra.mxu0 0.0
        %1584 = vmatprep.subr.mxu0 0.0
        %1585 = vmatpush1.msra.mxu0 0.0
        %1586 = vmatprep.subr.mxu0 0.0
        %1587 = vmatpush1.msra.mxu0 0.0
        %1588 = vmatprep.subr.mxu0 0.0
        %1589 = vmatpush1.msra.mxu0 0.0
        %1590 = vmatprep.subr.mxu0 0.0
        %1591 = vmatpush1.msra.mxu0 0.0
        %1592 = vmatprep.subr.mxu0 0.0
        %1593 = vmatpush1.msra.mxu0 0.0
        %1594 = vmatprep.subr.mxu0 0.0
        %1595 = vmatpush1.msra.mxu0 0.0
        %1596 = vmatprep.subr.mxu0 0.0
        %1597 = vmatpush1.msra.mxu0 0.0
        %1598 = vmatprep.subr.mxu0 0.0
        %1599 = vmatpush1.msra.mxu0 %v1378
        %1600 = vmatprep.subr.mxu0 0.0
        %1601 = vmatpush1.msra.mxu0 %v1377
        %1602 = vmatprep.subr.mxu0 0.0
        %1603 = vmatpush2.msra.mxu0 0.0
        %1604 = vmatprep.subr.mxu0 0.0
        %1605 = vmatpush2.msra.mxu0 0.0
        %1606 = vmatprep.subr.mxu0 0.0
        %1607 = vmatpush2.msra.mxu0 0.0
        %1608 = vmatprep.subr.mxu0 0.0
        %1609 = vmatpush2.msra.mxu0 0.0
        %1610 = vmatprep.subr.mxu0 0.0
        %1611 = vmatpush2.msra.mxu0 0.0
        %1612 = vmatprep.subr.mxu0 0.0
        %1613 = vmatpush2.msra.mxu0 0.0
        %1614 = vmatprep.subr.mxu0 0.0
        %1615 = vmatpush2.msra.mxu0 0.0
        %1616 = vmatprep.subr.mxu0 0.0
        %1617 = vmatpush2.msra.mxu0 0.0
        %1618 = vmatprep.subr.mxu0 0.0
        %1619 = vmatpush2.msra.mxu0 0.0
        %1620 = vmatprep.subr.mxu0 0.0
        %1621 = vmatpush2.msra.mxu0 0.0
        %1622 = vmatprep.subr.mxu0 0.0
        %1623 = vmatpush2.msra.mxu0 0.0
        %1624 = vmatprep.subr.mxu0 0.0
        %1625 = vmatpush2.msra.mxu0 0.0
        %1626 = vmatprep.subr.mxu0 0.0
        %1627 = vmatpush2.msra.mxu0 0.0
        %1628 = vmatprep.subr.mxu0 0.0
        %1629 = vmatpush2.msra.mxu0 0.0
        %1630 = vmatprep.subr.mxu0 0.0
        %1631 = vmatpush2.msra.mxu0 0.0
        %1632 = vmatprep.subr.mxu0 0.0
        %1633 = vmatpush2.msra.mxu0 0.0
        %1634 = vmatprep.mubr.f32.mxu0 0.0
        %1635 = vmatmul.mubr.f32.gmra.mxu0 %v1562
        %v1636 = vpop.f32.mrf.mxu0
        %v1637 = vadd.f32 0.0, %v1636
        %v1638 = vpop.f32.mrf.mxu0
        %1639 = vmatprep.mubr.f32.mxu0 0.0
        %1640 = vmatmul.mubr.f32.gmra.mxu0 %v1564
        %v1641 = vpop.f32.mrf.mxu0
        %v1642 = vadd.f32 0.0, %v1641
        %v1643 = vpop.f32.mrf.mxu0
        %1644 = vmatprep.mubr.f32.mxu0 0.0
        %1645 = vmatmul.mubr.f32.gmra.mxu0 %v1566
        %v1646 = vpop.f32.mrf.mxu0
        %v1647 = vadd.f32 0.0, %v1646
        %v1648 = vpop.f32.mrf.mxu0
        %1649 = vmatprep.mubr.f32.mxu0 0.0
        %1650 = vmatmul.mubr.f32.gmra.mxu0 %v1568
        %v1651 = vpop.f32.mrf.mxu0
        %v1652 = vadd.f32 0.0, %v1651
        %v1653 = vpop.f32.mrf.mxu0
        %1654 = vdwg.mxu0
        %v1655 = vmul.f32 %v1637, %v1637
        %v1656 = vmul.f32 %v1642, %v1642
        %v1657 = vmul.f32 %v1647, %v1647
        %v1658 = vmul.f32 %v1652, %v1652
        %v1659 = vadd.f32 %v1485, %v1655
        %v1660 = vadd.f32 %v1486, %v1656
        %v1661 = vadd.f32 %v1487, %v1657
        %v1662 = vadd.f32 %v1488, %v1658
        %v1663 = vmul.f32 %v1546, %v1496
        %v1664 = vmul.f32 %v1547, %v1496
        %v1665 = vmul.f32 %v1548, %v1496
        %v1666 = vmul.f32 %v1549, %v1496
        %1671 = vrot.lane.b32.xlu0 %v1663, 112
        %v1672 = vpop.permute.xlu0 %1671
        %1673 = vrot.lane.b32.xlu0 %v1664, 112
        %v1674 = vpop.permute.xlu0 %1673
        %1675 = vrot.lane.b32.xlu0 %v1665, 112
        %v1676 = vpop.permute.xlu0 %1675
        %1677 = vrot.lane.b32.xlu0 %v1666, 112
        %v1678 = vpop.permute.xlu0 %1677
        %v1683 = vsel %vm1391, %v1672, 0.0
        %1684 = vadd.xlane.f32.xlu0 %v1683
        %v1685 = vpop.xlane.xlu0 %1684
        %v1686 = vsel %vm1391, %v1674, 0.0
        %1687 = vadd.xlane.f32.xlu0 %v1686
        %v1688 = vpop.xlane.xlu0 %1687
        %v1689 = vsel %vm1391, %v1676, 0.0
        %1690 = vadd.xlane.f32.xlu0 %v1689
        %v1691 = vpop.xlane.xlu0 %1690
        %v1692 = vsel %vm1391, %v1678, 0.0
        %1693 = vadd.xlane.f32.xlu0 %v1692
        %v1694 = vpop.xlane.xlu0 %1693
        %1699 = vrot.lane.b32.xlu0 %v926, 112
        %v1700 = vpop.permute.xlu0 %1699
        %1701 = vrot.lane.b32.xlu0 %v931, 112
        %v1702 = vpop.permute.xlu0 %1701
        %1703 = vrot.lane.b32.xlu0 %v936, 112
        %v1704 = vpop.permute.xlu0 %1703
        %1705 = vrot.lane.b32.xlu0 %v941, 112
        %v1706 = vpop.permute.xlu0 %1705
        %v1711 = vmul.f32 %v1311, %v1700
        %v1712 = vmul.f32 %v1316, %v1702
        %v1713 = vmul.f32 %v1321, %v1704
        %v1714 = vmul.f32 %v1326, %v1706
        %1719 = vrot.lane.b32.xlu0 %v1711, 112
        %v1720 = vpop.permute.xlu0 %1719
        %1721 = vrot.lane.b32.xlu0 %v1712, 112
        %v1722 = vpop.permute.xlu0 %1721
        %1723 = vrot.lane.b32.xlu0 %v1713, 112
        %v1724 = vpop.permute.xlu0 %1723
        %1725 = vrot.lane.b32.xlu0 %v1714, 112
        %v1726 = vpop.permute.xlu0 %1725
        %v1727 = vsel %vm1391, %v1720, 0
        %v1729 = vsel %vm1391, %v1722, 0
        %v1731 = vsel %vm1391, %v1724, 0
        %v1733 = vsel %vm1391, %v1726, 0
        %1735 = vmatprep.subr.mxu0 0.0
        %1736 = vmatpush1.msra.mxu0 0.0
        %1737 = vmatprep.subr.mxu0 0.0
        %1738 = vmatpush1.msra.mxu0 0.0
        %1739 = vmatprep.subr.mxu0 0.0
        %1740 = vmatpush1.msra.mxu0 0.0
        %1741 = vmatprep.subr.mxu0 0.0
        %1742 = vmatpush1.msra.mxu0 0.0
        %1743 = vmatprep.subr.mxu0 0.0
        %1744 = vmatpush1.msra.mxu0 0.0
        %1745 = vmatprep.subr.mxu0 0.0
        %1746 = vmatpush1.msra.mxu0 0.0
        %1747 = vmatprep.subr.mxu0 0.0
        %1748 = vmatpush1.msra.mxu0 0.0
        %1749 = vmatprep.subr.mxu0 0.0
        %1750 = vmatpush1.msra.mxu0 0.0
        %1751 = vmatprep.subr.mxu0 0.0
        %1752 = vmatpush1.msra.mxu0 0.0
        %1753 = vmatprep.subr.mxu0 0.0
        %1754 = vmatpush1.msra.mxu0 0.0
        %1755 = vmatprep.subr.mxu0 0.0
        %1756 = vmatpush1.msra.mxu0 0.0
        %1757 = vmatprep.subr.mxu0 0.0
        %1758 = vmatpush1.msra.mxu0 0.0
        %1759 = vmatprep.subr.mxu0 0.0
        %1760 = vmatpush1.msra.mxu0 0.0
        %1761 = vmatprep.subr.mxu0 0.0
        %1762 = vmatpush1.msra.mxu0 0.0
        %1763 = vmatprep.subr.mxu0 0.0
        %1764 = vmatpush1.msra.mxu0 %v1378
        %1765 = vmatprep.subr.mxu0 0.0
        %1766 = vmatpush1.msra.mxu0 %v1377
        %1767 = vmatprep.subr.mxu0 0.0
        %1768 = vmatpush2.msra.mxu0 0.0
        %1769 = vmatprep.subr.mxu0 0.0
        %1770 = vmatpush2.msra.mxu0 0.0
        %1771 = vmatprep.subr.mxu0 0.0
        %1772 = vmatpush2.msra.mxu0 0.0
        %1773 = vmatprep.subr.mxu0 0.0
        %1774 = vmatpush2.msra.mxu0 0.0
        %1775 = vmatprep.subr.mxu0 0.0
        %1776 = vmatpush2.msra.mxu0 0.0
        %1777 = vmatprep.subr.mxu0 0.0
        %1778 = vmatpush2.msra.mxu0 0.0
        %1779 = vmatprep.subr.mxu0 0.0
        %1780 = vmatpush2.msra.mxu0 0.0
        %1781 = vmatprep.subr.mxu0 0.0
        %1782 = vmatpush2.msra.mxu0 0.0
        %1783 = vmatprep.subr.mxu0 0.0
        %1784 = vmatpush2.msra.mxu0 0.0
        %1785 = vmatprep.subr.mxu0 0.0
        %1786 = vmatpush2.msra.mxu0 0.0
        %1787 = vmatprep.subr.mxu0 0.0
        %1788 = vmatpush2.msra.mxu0 0.0
        %1789 = vmatprep.subr.mxu0 0.0
        %1790 = vmatpush2.msra.mxu0 0.0
        %1791 = vmatprep.subr.mxu0 0.0
        %1792 = vmatpush2.msra.mxu0 0.0
        %1793 = vmatprep.subr.mxu0 0.0
        %1794 = vmatpush2.msra.mxu0 0.0
        %1795 = vmatprep.subr.mxu0 0.0
        %1796 = vmatpush2.msra.mxu0 0.0
        %1797 = vmatprep.subr.mxu0 0.0
        %1798 = vmatpush2.msra.mxu0 0.0
        %1799 = vmatprep.mubr.f32.mxu0 0.0
        %1800 = vmatmul.mubr.f32.gmra.mxu0 %v1727
        %v1801 = vpop.f32.mrf.mxu0
        %v1802 = vadd.f32 0.0, %v1801
        %v1803 = vpop.f32.mrf.mxu0
        %1804 = vmatprep.mubr.f32.mxu0 0.0
        %1805 = vmatmul.mubr.f32.gmra.mxu0 %v1729
        %v1806 = vpop.f32.mrf.mxu0
        %v1807 = vadd.f32 0.0, %v1806
        %v1808 = vpop.f32.mrf.mxu0
        %1809 = vmatprep.mubr.f32.mxu0 0.0
        %1810 = vmatmul.mubr.f32.gmra.mxu0 %v1731
        %v1811 = vpop.f32.mrf.mxu0
        %v1812 = vadd.f32 0.0, %v1811
        %v1813 = vpop.f32.mrf.mxu0
        %1814 = vmatprep.mubr.f32.mxu0 0.0
        %1815 = vmatmul.mubr.f32.gmra.mxu0 %v1733
        %v1816 = vpop.f32.mrf.mxu0
        %v1817 = vadd.f32 0.0, %v1816
        %v1818 = vpop.f32.mrf.mxu0
        %1819 = vdwg.mxu0
        %v1820 = vmul.f32 %v1802, %v1802
        %v1821 = vmul.f32 %v1807, %v1807
        %v1822 = vmul.f32 %v1812, %v1812
        %v1823 = vmul.f32 %v1817, %v1817
        %v1824 = vadd.f32 %v1659, %v1820
        %v1825 = vadd.f32 %v1660, %v1821
        %v1826 = vadd.f32 %v1661, %v1822
        %v1827 = vadd.f32 %v1662, %v1823
        %v1828 = vmul.f32 %v1711, %v1496
        %v1829 = vmul.f32 %v1712, %v1496
        %v1830 = vmul.f32 %v1713, %v1496
        %v1831 = vmul.f32 %v1714, %v1496
        %1836 = vrot.lane.b32.xlu0 %v1828, 112
        %v1837 = vpop.permute.xlu0 %1836
        %1838 = vrot.lane.b32.xlu0 %v1829, 112
        %v1839 = vpop.permute.xlu0 %1838
        %1840 = vrot.lane.b32.xlu0 %v1830, 112
        %v1841 = vpop.permute.xlu0 %1840
        %1842 = vrot.lane.b32.xlu0 %v1831, 112
        %v1843 = vpop.permute.xlu0 %1842
        %v1848 = vsel %vm1391, %v1837, 0.0
        %1849 = vadd.xlane.f32.xlu0 %v1848
        %v1850 = vpop.xlane.xlu0 %1849
        %v1851 = vsel %vm1391, %v1839, 0.0
        %1852 = vadd.xlane.f32.xlu0 %v1851
        %v1853 = vpop.xlane.xlu0 %1852
        %v1854 = vsel %vm1391, %v1841, 0.0
        %1855 = vadd.xlane.f32.xlu0 %v1854
        %v1856 = vpop.xlane.xlu0 %1855
        %v1857 = vsel %vm1391, %v1843, 0.0
        %1858 = vadd.xlane.f32.xlu0 %v1857
        %v1859 = vpop.xlane.xlu0 %1858
        %v1860 = vrsqrt.pop %v1824
        %v1861 = vmul.f32 %v1824, %v1860
        %vm1862 = vcmp.eq.f32.partialorder %v1824, inf
        %v1863 = vsel %vm1862, %v1824, %v1861
        %vm1864 = vcmp.eq.f32.partialorder %v1824, 0.0
        %v1865 = vand.u32 %v1824, 2147483648
        %v1866 = vsel %vm1864, %v1865, %v1863
        %v1867 = vrsqrt.pop %v1825
        %v1868 = vmul.f32 %v1825, %v1867
        %vm1869 = vcmp.eq.f32.partialorder %v1825, inf
        %v1870 = vsel %vm1869, %v1825, %v1868
        %vm1871 = vcmp.eq.f32.partialorder %v1825, 0.0
        %v1872 = vand.u32 %v1825, 2147483648
        %v1873 = vsel %vm1871, %v1872, %v1870
        %v1874 = vrsqrt.pop %v1826
        %v1875 = vmul.f32 %v1826, %v1874
        %vm1876 = vcmp.eq.f32.partialorder %v1826, inf
        %v1877 = vsel %vm1876, %v1826, %v1875
        %vm1878 = vcmp.eq.f32.partialorder %v1826, 0.0
        %v1879 = vand.u32 %v1826, 2147483648
        %v1880 = vsel %vm1878, %v1879, %v1877
        %v1881 = vrsqrt.pop %v1827
        %v1882 = vmul.f32 %v1827, %v1881
        %vm1883 = vcmp.eq.f32.partialorder %v1827, inf
        %v1884 = vsel %vm1883, %v1827, %v1882
        %vm1885 = vcmp.eq.f32.partialorder %v1827, 0.0
        %v1886 = vand.u32 %v1827, 2147483648
        %v1887 = vsel %vm1885, %v1886, %v1884
        %v1888 = vld [vmem:[#allocation11] sm:$0xff]
        %v1889 = vld [vmem:[#allocation11 + $0x8] sm:$0xff]
        %v1890 = vld [vmem:[#allocation13] sm:$0xff]
        %v1891 = vld [vmem:[#allocation13 + $0x8] sm:$0xff]
        %v1893 = vsel %vm1391, %v1866, 0
        %v1896 = vsel %vm1391, %v1873, 0
        %v1899 = vsel %vm1391, %v1880, 0
        %v1902 = vsel %vm1391, %v1887, 0
        %1904 = vmatprep.subr.mxu0 0.0
        %1905 = vmatpush1.msra.mxu0 0.0
        %1906 = vmatprep.subr.mxu0 0.0
        %1907 = vmatpush1.msra.mxu0 0.0
        %1908 = vmatprep.subr.mxu0 0.0
        %1909 = vmatpush1.msra.mxu0 0.0
        %1910 = vmatprep.subr.mxu0 0.0
        %1911 = vmatpush1.msra.mxu0 0.0
        %1912 = vmatprep.subr.mxu0 0.0
        %1913 = vmatpush1.msra.mxu0 0.0
        %1914 = vmatprep.subr.mxu0 0.0
        %1915 = vmatpush1.msra.mxu0 0.0
        %1916 = vmatprep.subr.mxu0 0.0
        %1917 = vmatpush1.msra.mxu0 0.0
        %1918 = vmatprep.subr.mxu0 0.0
        %1919 = vmatpush1.msra.mxu0 0.0
        %1920 = vmatprep.subr.mxu0 0.0
        %1921 = vmatpush1.msra.mxu0 0.0
        %1922 = vmatprep.subr.mxu0 0.0
        %1923 = vmatpush1.msra.mxu0 0.0
        %1924 = vmatprep.subr.mxu0 0.0
        %1925 = vmatpush1.msra.mxu0 0.0
        %1926 = vmatprep.subr.mxu0 0.0
        %1927 = vmatpush1.msra.mxu0 0.0
        %1928 = vmatprep.subr.mxu0 0.0
        %1929 = vmatpush1.msra.mxu0 0.0
        %1930 = vmatprep.subr.mxu0 0.0
        %1931 = vmatpush1.msra.mxu0 0.0
        %1932 = vmatprep.subr.mxu0 0.0
        %1933 = vmatpush1.msra.mxu0 %v1891
        %1934 = vmatprep.subr.mxu0 0.0
        %1935 = vmatpush1.msra.mxu0 %v1890
        %1936 = vmatprep.subr.mxu0 0.0
        %1937 = vmatpush2.msra.mxu0 0.0
        %1938 = vmatprep.subr.mxu0 0.0
        %1939 = vmatpush2.msra.mxu0 0.0
        %1940 = vmatprep.subr.mxu0 0.0
        %1941 = vmatpush2.msra.mxu0 0.0
        %1942 = vmatprep.subr.mxu0 0.0
        %1943 = vmatpush2.msra.mxu0 0.0
        %1944 = vmatprep.subr.mxu0 0.0
        %1945 = vmatpush2.msra.mxu0 0.0
        %1946 = vmatprep.subr.mxu0 0.0
        %1947 = vmatpush2.msra.mxu0 0.0
        %1948 = vmatprep.subr.mxu0 0.0
        %1949 = vmatpush2.msra.mxu0 0.0
        %1950 = vmatprep.subr.mxu0 0.0
        %1951 = vmatpush2.msra.mxu0 0.0
        %1952 = vmatprep.subr.mxu0 0.0
        %1953 = vmatpush2.msra.mxu0 0.0
        %1954 = vmatprep.subr.mxu0 0.0
        %1955 = vmatpush2.msra.mxu0 0.0
        %1956 = vmatprep.subr.mxu0 0.0
        %1957 = vmatpush2.msra.mxu0 0.0
        %1958 = vmatprep.subr.mxu0 0.0
        %1959 = vmatpush2.msra.mxu0 0.0
        %1960 = vmatprep.subr.mxu0 0.0
        %1961 = vmatpush2.msra.mxu0 0.0
        %1962 = vmatprep.subr.mxu0 0.0
        %1963 = vmatpush2.msra.mxu0 0.0
        %1964 = vmatprep.subr.mxu0 0.0
        %1965 = vmatpush2.msra.mxu0 0.0
        %1966 = vmatprep.subr.mxu0 0.0
        %1967 = vmatpush2.msra.mxu0 0.0
        %1968 = vmatprep.mubr.f32.mxu0 0.0
        %1969 = vmatmul.mubr.f32.gmra.mxu0 %v1893
        %v1970 = vpop.f32.mrf.mxu0
        %v1971 = vadd.f32 0.0, %v1970
        %v1972 = vpop.f32.mrf.mxu0
        %1973 = vmatprep.mubr.f32.mxu0 0.0
        %1974 = vmatmul.mubr.f32.gmra.mxu0 %v1896
        %v1975 = vpop.f32.mrf.mxu0
        %v1976 = vadd.f32 0.0, %v1975
        %v1977 = vpop.f32.mrf.mxu0
        %1978 = vmatprep.mubr.f32.mxu0 0.0
        %1979 = vmatmul.mubr.f32.gmra.mxu0 %v1899
        %v1980 = vpop.f32.mrf.mxu0
        %v1981 = vadd.f32 0.0, %v1980
        %v1982 = vpop.f32.mrf.mxu0
        %1983 = vmatprep.mubr.f32.mxu0 0.0
        %1984 = vmatmul.mubr.f32.gmra.mxu0 %v1902
        %v1985 = vpop.f32.mrf.mxu0
        %v1986 = vadd.f32 0.0, %v1985
        %v1987 = vpop.f32.mrf.mxu0
        %1988 = vdwg.mxu0
        %v1990 = vsel %vm1391, %v1353, 0
        %v1993 = vsel %vm1391, %v1354, 0
        %v1996 = vsel %vm1391, %v1355, 0
        %v1999 = vsel %vm1391, %v1356, 0
        %2001 = vmatprep.subr.mxu0 0.0
        %2002 = vmatpush1.msra.mxu0 0.0
        %2003 = vmatprep.subr.mxu0 0.0
        %2004 = vmatpush1.msra.mxu0 0.0
        %2005 = vmatprep.subr.mxu0 0.0
        %2006 = vmatpush1.msra.mxu0 0.0
        %2007 = vmatprep.subr.mxu0 0.0
        %2008 = vmatpush1.msra.mxu0 0.0
        %2009 = vmatprep.subr.mxu0 0.0
        %2010 = vmatpush1.msra.mxu0 0.0
        %2011 = vmatprep.subr.mxu0 0.0
        %2012 = vmatpush1.msra.mxu0 0.0
        %2013 = vmatprep.subr.mxu0 0.0
        %2014 = vmatpush1.msra.mxu0 0.0
        %2015 = vmatprep.subr.mxu0 0.0
        %2016 = vmatpush1.msra.mxu0 0.0
        %2017 = vmatprep.subr.mxu0 0.0
        %2018 = vmatpush1.msra.mxu0 0.0
        %2019 = vmatprep.subr.mxu0 0.0
        %2020 = vmatpush1.msra.mxu0 0.0
        %2021 = vmatprep.subr.mxu0 0.0
        %2022 = vmatpush1.msra.mxu0 0.0
        %2023 = vmatprep.subr.mxu0 0.0
        %2024 = vmatpush1.msra.mxu0 0.0
        %2025 = vmatprep.subr.mxu0 0.0
        %2026 = vmatpush1.msra.mxu0 0.0
        %2027 = vmatprep.subr.mxu0 0.0
        %2028 = vmatpush1.msra.mxu0 0.0
        %2029 = vmatprep.subr.mxu0 0.0
        %2030 = vmatpush1.msra.mxu0 %v1889
        %2031 = vmatprep.subr.mxu0 0.0
        %2032 = vmatpush1.msra.mxu0 %v1888
        %2033 = vmatprep.subr.mxu0 0.0
        %2034 = vmatpush2.msra.mxu0 0.0
        %2035 = vmatprep.subr.mxu0 0.0
        %2036 = vmatpush2.msra.mxu0 0.0
        %2037 = vmatprep.subr.mxu0 0.0
        %2038 = vmatpush2.msra.mxu0 0.0
        %2039 = vmatprep.subr.mxu0 0.0
        %2040 = vmatpush2.msra.mxu0 0.0
        %2041 = vmatprep.subr.mxu0 0.0
        %2042 = vmatpush2.msra.mxu0 0.0
        %2043 = vmatprep.subr.mxu0 0.0
        %2044 = vmatpush2.msra.mxu0 0.0
        %2045 = vmatprep.subr.mxu0 0.0
        %2046 = vmatpush2.msra.mxu0 0.0
        %2047 = vmatprep.subr.mxu0 0.0
        %2048 = vmatpush2.msra.mxu0 0.0
        %2049 = vmatprep.subr.mxu0 0.0
        %2050 = vmatpush2.msra.mxu0 0.0
        %2051 = vmatprep.subr.mxu0 0.0
        %2052 = vmatpush2.msra.mxu0 0.0
        %2053 = vmatprep.subr.mxu0 0.0
        %2054 = vmatpush2.msra.mxu0 0.0
        %2055 = vmatprep.subr.mxu0 0.0
        %2056 = vmatpush2.msra.mxu0 0.0
        %2057 = vmatprep.subr.mxu0 0.0
        %2058 = vmatpush2.msra.mxu0 0.0
        %2059 = vmatprep.subr.mxu0 0.0
        %2060 = vmatpush2.msra.mxu0 0.0
        %2061 = vmatprep.subr.mxu0 0.0
        %2062 = vmatpush2.msra.mxu0 0.0
        %2063 = vmatprep.subr.mxu0 0.0
        %2064 = vmatpush2.msra.mxu0 0.0
        %2065 = vmatprep.mubr.f32.mxu0 0.0
        %2066 = vmatmul.mubr.f32.gmra.mxu0 %v1990
        %v2067 = vpop.f32.mrf.mxu0
        %v2068 = vadd.f32 %v1971, %v2067
        %v2069 = vpop.f32.mrf.mxu0
        %2070 = vmatprep.mubr.f32.mxu0 0.0
        %2071 = vmatmul.mubr.f32.gmra.mxu0 %v1993
        %v2072 = vpop.f32.mrf.mxu0
        %v2073 = vadd.f32 %v1976, %v2072
        %v2074 = vpop.f32.mrf.mxu0
        %2075 = vmatprep.mubr.f32.mxu0 0.0
        %2076 = vmatmul.mubr.f32.gmra.mxu0 %v1996
        %v2077 = vpop.f32.mrf.mxu0
        %v2078 = vadd.f32 %v1981, %v2077
        %v2079 = vpop.f32.mrf.mxu0
        %2080 = vmatprep.mubr.f32.mxu0 0.0
        %2081 = vmatmul.mubr.f32.gmra.mxu0 %v1999
        %v2082 = vpop.f32.mrf.mxu0
        %v2083 = vadd.f32 %v1986, %v2082
        %v2084 = vpop.f32.mrf.mxu0
        %2085 = vdwg.mxu0
        %v2086 = vld [vmem:[%s12] sm:$0x1]
        %v2088 = vlaneseq
        %v2089 = vshrl.u32 %v2088, 7
        %v2090 = vsub.s32 0, %v2089
        %v2091 = vrot.slane %v2086, %v2090
        %v2093 = vadd.f32 %v2068, %v2091
        %v2094 = vadd.f32 %v2073, %v2091
        %v2095 = vadd.f32 %v2078, %v2091
        %v2096 = vadd.f32 %v2083, %v2091
        %v2097 = vxor.u32 %v2093, 2147483648
        %v2098 = vxor.u32 %v2094, 2147483648
        %v2099 = vxor.u32 %v2095, 2147483648
        %v2100 = vxor.u32 %v2096, 2147483648
        %v2101 = vmul.f32 %v2097, 1.442695
        %v2102 = vpow.pop %v2101
        %v2103 = vmul.f32 %v2098, 1.442695
        %v2104 = vpow.pop %v2103
        %v2105 = vmul.f32 %v2099, 1.442695
        %v2106 = vpow.pop %v2105
        %v2107 = vmul.f32 %v2100, 1.442695
        %v2108 = vpow.pop %v2107
        %v2109 = vadd.f32 %v2102, 1.0
        %v2110 = vadd.f32 %v2104, 1.0
        %v2111 = vadd.f32 %v2106, 1.0
        %v2112 = vadd.f32 %v2108, 1.0
        %v2113 = vrcp.pop %v2109
        %v2114 = vmul.f32 1.0, %v2113
        %v2115 = vrcp.pop %v2110
        %v2116 = vmul.f32 1.0, %v2115
        %v2117 = vrcp.pop %v2111
        %v2118 = vmul.f32 1.0, %v2117
        %v2119 = vrcp.pop %v2112
        %v2120 = vmul.f32 1.0, %v2119
        %v2121 = vmul.f32 %v2093, %v2114
        %v2122 = vmul.f32 %v2094, %v2116
        %v2123 = vmul.f32 %v2095, %v2118
        %v2124 = vmul.f32 %v2096, %v2120
        %v2125 = vld [vmem:[%s13] sm:$0x1]
        %v2127 = vlaneseq
        %v2128 = vshrl.u32 %v2127, 7
        %v2129 = vsub.s32 0, %v2128
        %v2130 = vrot.slane %v2125, %v2129
        %v2132 = vmul.f32 %v2121, %v2130
        %v2133 = vmul.f32 %v2122, %v2130
        %v2134 = vmul.f32 %v2123, %v2130
        %v2135 = vmul.f32 %v2124, %v2130
        %v2136 = vsel %vm1391, %v2132, 0.0
        %2137 = vadd.xlane.f32.xlu0 %v2136
        %v2138 = vpop.xlane.xlu0 %2137
        %v2139 = vsel %vm1391, %v2133, 0.0
        %2140 = vadd.xlane.f32.xlu0 %v2139
        %v2141 = vpop.xlane.xlu0 %2140
        %v2142 = vsel %vm1391, %v2134, 0.0
        %2143 = vadd.xlane.f32.xlu0 %v2142
        %v2144 = vpop.xlane.xlu0 %2143
        %v2145 = vsel %vm1391, %v2135, 0.0
        %2146 = vadd.xlane.f32.xlu0 %v2145
        %v2147 = vpop.xlane.xlu0 %2146
        %v2148 = vld [vmem:[#allocation2] sm:$0x1]
        %v2150 = vlaneseq
        %v2151 = vshrl.u32 %v2150, 7
        %v2152 = vsub.s32 0, %v2151
        %v2153 = vrot.slane %v2148, %v2152
        %v2155 = vadd.f32 %v2138, %v2153
        %v2156 = vadd.f32 %v2141, %v2153
        %v2157 = vadd.f32 %v2144, %v2153
        %v2158 = vadd.f32 %v2147, %v2153
        %v2159 = vmul.f32 %v2155, %v1520
        %v2160 = vmul.f32 %v2156, %v1523
        %v2161 = vmul.f32 %v2157, %v1526
        %v2162 = vmul.f32 %v2158, %v1529
        %v2163 = vmul.f32 %v2155, %v1685
        %v2164 = vmul.f32 %v2156, %v1688
        %v2165 = vmul.f32 %v2157, %v1691
        %v2166 = vmul.f32 %v2158, %v1694
        %v2167 = vmul.f32 %v2155, %v1850
        %v2168 = vmul.f32 %v2156, %v1853
        %v2169 = vmul.f32 %v2157, %v1856
        %v2170 = vmul.f32 %v2158, %v1859
        %2175 = vrot.lane.b32.xlu0 %v2163, 1
        %v2176 = vpop.permute.xlu0 %2175
        %2177 = vrot.lane.b32.xlu0 %v2164, 1
        %v2178 = vpop.permute.xlu0 %2177
        %2179 = vrot.lane.b32.xlu0 %v2165, 1
        %v2180 = vpop.permute.xlu0 %2179
        %2181 = vrot.lane.b32.xlu0 %v2166, 1
        %v2182 = vpop.permute.xlu0 %2181
        %2191 = vrot.lane.b32.xlu0 %v2167, 2
        %v2192 = vpop.permute.xlu0 %2191
        %2193 = vrot.lane.b32.xlu0 %v2168, 2
        %v2194 = vpop.permute.xlu0 %2193
        %2195 = vrot.lane.b32.xlu0 %v2169, 2
        %v2196 = vpop.permute.xlu0 %2195
        %2197 = vrot.lane.b32.xlu0 %v2170, 2
        %v2198 = vpop.permute.xlu0 %2197
        %vm2203 = vcmask 7168
        %v2204 = vsel %vm2203, %v2159, %v2176
        %v2205 = vsel %vm2203, %v2160, %v2178
        %v2206 = vsel %vm2203, %v2161, %v2180
        %v2207 = vsel %vm2203, %v2162, %v2182
        %vm2208 = vcmask 15360
        %v2209 = vsel %vm2208, %v2204, %v2192
        %v2210 = vsel %vm2208, %v2205, %v2194
        %v2211 = vsel %vm2208, %v2206, %v2196
        %v2212 = vsel %vm2208, %v2207, %v2198
        %vm2213 = vcmask 23552
        %v2214 = vsel %vm2213, %v2209, 0.0
        %v2215 = vsel %vm2213, %v2210, 0.0
        %v2216 = vsel %vm2213, %v2211, 0.0
        %v2217 = vsel %vm2213, %v2212, 0.0
        %vm2218 = vcmask 64512
        %2219 = vst.msk [vmem:[%s618] sm:$0xff] %vm2218, %v2214
        %2220 = vst.msk [vmem:[%s618 + $0x8] sm:$0xff] %vm2218, %v2215
        %2221 = vst.msk [vmem:[%s618 + $0x10] sm:$0xff] %vm2218, %v2216
        %2222 = vst.msk [vmem:[%s618 + $0x18] sm:$0xff] %vm2218, %v2217
        %s2223 = smul.u32 4, %s32
        %p2224 = scmp.lt.s32.totalorder %s2223, 7
        %s2225 = scalar_select %p2224, %s2223, 7
        %s2226 = smul.addr %s2225, 8
        %s2227 = scalar_lea.vmem %s15, %s2226
        // Predicated region
        $region109: #{tpu_custom_call.1} parent=79 // pred_check
          %p2228 = pneg %p375
        $region110: #{tpu_custom_call.1} parent=79 // pred_check_branch
          %2230 = sbr.rel (%p2228) target = $region112
        $region111: #{tpu_custom_call.1} parent=79 // pred_region
          %s2231 = smul.u32 4, %s32
        $region112: #{tpu_custom_call.1} parent=79 // pred_fallthru
          _
      $region80: #{tpu_custom_call.1} parent=5 // pred_fallthru
        _
      %p2232 = scmp.le.s32.totalorder 2, %s27
      // Predicated region
      $region113: #{tpu_custom_call.1} parent=5 // pred_check
        %p2233 = pneg %p2232
      $region114: #{tpu_custom_call.1} parent=5 // pred_check_branch
        %2235 = sbr.rel (%p2233) target = $region116
      $region115: #{tpu_custom_call.1} parent=5 // pred_region
        %s2236 = ssub.s32 %s27, 2
        // Predicated region
        $region117: #{tpu_custom_call.1} parent=115 // pred_check
          %p2237 = pneg %p381
        $region118: #{tpu_custom_call.1} parent=115 // pred_check_branch
          %2239 = sbr.rel (%p2237) target = $region120
        $region119: #{tpu_custom_call.1} parent=115 // pred_region
          %s2240 = smul.u32 4, %s33
          %p2241 = scmp.lt.s32.totalorder %s2240, 7
          %s2242 = scalar_select %p2241, %s2240, 7
          %s2243 = smul.addr %s2242, 8
          %s2244 = scalar_lea.vmem %s15, %s2243
        $region120: #{tpu_custom_call.1} parent=115 // pred_fallthru
          _
      $region116: #{tpu_custom_call.1} parent=5 // pred_fallthru
        _
    $region6: #{tpu_custom_call.1} parent=1 // loop_footer
      %s31 = sadd.s32 1, %s27
    $region7: #{tpu_custom_call.1} parent=1 // loop_footer_branch
      %26 = sbr.rel target = $region3
    $region8: #{tpu_custom_call.1} parent=1 // loop_exit
      _
    %2245 = vsyncpa [#allocation4], 1
    %s2246 = scalar_lea.sflag [#allocation4], 1
    %2247 = vsyncpa %s2246, 1
    %2248 = vsyncpa [#allocation6], 1
    %2249 = vsyncpa [#allocation9], 1
    %2250 = vsyncpa [#allocation12], 1

</llo_original>
